<compile_context>
chip_gen: v6e
topology: v6e:2x2x1
jax: 0.10.0
libtpu: 0.0.40
codegen_flags: <defaults>
</compile_context>

<pallas_src>
import numpy as np
import jax
import jax.numpy as jnp
from jax.experimental import pallas as pl
from jax.experimental.pallas import tpu as pltpu


# ----------------------------------------------------------------------------
# helpers
# ----------------------------------------------------------------------------
def _full_spec(shape):
    nd = len(shape)
    return pl.BlockSpec(shape, lambda i, _nd=nd: (0,) * _nd)


# ----------------------------------------------------------------------------
# parameter init (deterministic, PyTorch-like fan-in uniform; BN gamma=1 beta=0)
# ----------------------------------------------------------------------------
def init_params(key, dim, channels=3, width=2):
    c1, c2 = 3 * width, 8 * width
    n_logits = int(np.prod(dim))
    keys = iter(jax.random.split(key, 8))

    def uni(k, shape, fan_in):
        bound = 1.0 / np.sqrt(fan_in)
        return jax.random.uniform(k, shape, jnp.float32, -bound, bound)

    p = {}
    p["c1_w"] = uni(next(keys), (c1, channels, 5, 5), channels * 25)
    p["c1_b"] = uni(next(keys), (c1,), channels * 25)   # no-op before training-mode BN
    p["bn1_g"] = jnp.ones((c1,), jnp.float32)
    p["bn1_b"] = jnp.zeros((c1,), jnp.float32)
    p["c2_w"] = uni(next(keys), (c2, c1, 5, 5), c1 * 25)
    p["c2_b"] = uni(next(keys), (c2,), c1 * 25)         # no-op before training-mode BN
    p["bn2_g"] = jnp.ones((c2,), jnp.float32)
    p["bn2_b"] = jnp.zeros((c2,), jnp.float32)
    # Linear weights stored as (in, out)
    p["l_w"] = uni(next(keys), (c2, n_logits), c2)
    p["l_b"] = uni(next(keys), (n_logits,), c2)
    p["s_w"] = uni(next(keys), (c2, 1), c2)
    p["s_b"] = uni(next(keys), (1,), c2)
    return p


# ----------------------------------------------------------------------------
# one-time operand preparation (banded conv matrices + 0/1 selector matrices)
# ----------------------------------------------------------------------------
def prepare_operands(params, channels, width, H, W, batch):
    Cin, C1, C2, KH, KW = channels, 3 * width, 8 * width, 5, 5
    OH1, OW1 = H - 4, W - 4
    PH1, PW1 = OH1 // 2, OW1 // 2
    OH2, OW2 = PH1 - 4, PW1 - 4
    B = batch

    w1 = np.asarray(params["c1_w"], np.float32)   # (C1, Cin, 5, 5)
    w2 = np.asarray(params["c2_w"], np.float32)   # (C2, C1, 5, 5)

    # K1[kh*W*Cin + w*Cin + ci, wo*C1 + co] = w1[co, ci, kh, w-wo]   (banded over W)
    K1 = np.zeros((KH, W, Cin, OW1, C1), np.float32)
    for kw in range(KW):
        wt = np.transpose(w1[:, :, :, kw], (2, 1, 0))            # (KH, Cin, C1)
        for wo in range(OW1):
            K1[:, wo + kw, :, wo, :] = wt
    K1 = K1.reshape(KH * W * Cin, OW1 * C1)

    # K2[kh*PW1*C1 + q*C1 + ci, wo*C2 + co] = w2[co, ci, kh, q-wo]
    K2 = np.zeros((KH, PW1, C1, OW2, C2), np.float32)
    for kw in range(KW):
        wt = np.transpose(w2[:, :, :, kw], (2, 1, 0))            # (KH, C1, C2)
        for wo in range(OW2):
            K2[:, wo + kw, :, wo, :] = wt
    K2 = K2.reshape(KH * PW1 * C1, OW2 * C2)

    # channel-sum selectors (interleaved lanes -> per-channel) and their transposes
    S1 = np.tile(np.eye(C1, dtype=np.float32), (OW1, 1))         # (OW1*C1, C1)
    S2 = np.tile(np.eye(C2, dtype=np.float32), (OW2, 1))         # (OW2*C2, C2)

    # maxpool column selectors: pick even / odd w positions (per channel)
    E1 = np.zeros((OW1 * C1, PW1 * C1), np.float32)
    O1 = np.zeros((OW1 * C1, PW1 * C1), np.float32)
    for q in range(PW1):
        for c in range(C1):
            E1[(2 * q) * C1 + c, q * C1 + c] = 1.0
            O1[(2 * q + 1) * C1 + c, q * C1 + c] = 1.0

    # maxpool row selectors, block-diagonal over the batch-stacked rows
    Pe = np.zeros((B * PH1, B * OH1), np.float32)
    Po = np.zeros((B * PH1, B * OH1), np.float32)
    for bi in range(B):
        for p in range(PH1):
            Pe[bi * PH1 + p, bi * OH1 + 2 * p] = 1.0
            Po[bi * PH1 + p, bi * OH1 + 2 * p + 1] = 1.0

    # per-batch row-sum selector for the batched tail
    Bs = np.zeros((B, B * OH2), np.float32)
    for bi in range(B):
        Bs[bi, bi * OH2:(bi + 1) * OH2] = 1.0

    g1 = np.asarray(params["bn1_g"], np.float32).reshape(1, C1)
    be1 = np.asarray(params["bn1_b"], np.float32).reshape(1, C1)
    g2 = np.asarray(params["bn2_g"], np.float32).reshape(1, C2)
    be2 = np.asarray(params["bn2_b"], np.float32).reshape(1, C2)

    # merged FC heads: [logits | shift]
    Wh = np.concatenate([np.asarray(params["l_w"], np.float32),
                         np.asarray(params["s_w"], np.float32)], axis=1)  # (C2, nl+1)
    bh = np.concatenate([np.asarray(params["l_b"], np.float32),
                         np.asarray(params["s_b"], np.float32)]).reshape(1, -1)

    ops = dict(
        K1=jnp.asarray(K1, jnp.bfloat16),      # bf16: halves the dominant DMA,
        K2=jnp.asarray(K2, jnp.bfloat16),      # feeds the MXU its native bf16 path
        S1=jnp.asarray(S1), S1T=jnp.asarray(S1.T.copy()),
        g1=jnp.asarray(g1), be1=jnp.asarray(be1),
        E1=jnp.asarray(E1), O1=jnp.asarray(O1),
        Pe=jnp.asarray(Pe), Po=jnp.asarray(Po),
        S2=jnp.asarray(S2), S2T=jnp.asarray(S2.T.copy()),
        g2=jnp.asarray(g2), be2=jnp.asarray(be2),
        Bs=jnp.asarray(Bs), Wh=jnp.asarray(Wh), bh=jnp.asarray(bh),
    )
    return ops


# ----------------------------------------------------------------------------
# fused forward builder (single pallas_call)
# ----------------------------------------------------------------------------
def make_forward(params, dim, channels=3, width=2, batch=2, spatial=32):
    Cin, C1, C2, KH = channels, 3 * width, 8 * width, 5
    H = W = spatial
    OH1, OW1 = H - 4, W - 4
    PH1, PW1 = OH1 // 2, OW1 // 2
    OH2, OW2 = PH1 - 4, PW1 - 4
    assert OH2 >= 1 and OW2 >= 1, "spatial size too small for the conv stack"
    NLOG = int(np.prod(dim))
    B = batch
    N1 = B * OH1 * OW1
    N2 = B * OH2 * OW2
    EPS = 1e-5

    ops = prepare_operands(params, channels, width, H, W, batch)
    names = ("K1", "S1", "S1T", "g1", "be1", "E1", "O1", "Pe", "Po",
             "K2", "S2", "S2T", "g2", "be2", "Bs", "Wh", "bh")
    in_arrays = [ops[k] for k in names]

    def kernel(xd_ref, k1_ref, s1_ref, s1t_ref, g1_ref, be1_ref,
               e1_ref, o1_ref, pe_ref, po_ref, k2_ref, s2_ref, s2t_ref,
               g2_ref, be2_ref, bs_ref, wh_ref, bh_ref, head_ref):
        f32 = jnp.float32
        bf16 = jnp.bfloat16

        # ---- conv1: one bf16 MXU matmul (batch + Cin + KH all in the contraction) ----
        slabs = []
        for bi in range(B):
            d_b = xd_ref[bi]                                       # (H, W*Cin), diff'd in wrapper
            slabs.append(jnp.concatenate(
                [d_b[kh:kh + OH1, :] for kh in range(KH)], axis=-1))   # (OH1, KH*W*Cin)
        lhs1 = jnp.concatenate(slabs, axis=0).astype(bf16)         # (B*OH1, KH*W*Cin)
        y1 = jnp.dot(lhs1, k1_ref[...], preferred_element_type=f32)   # (B*OH1, OW1*C1)

        # ---- BN1 stats, single pass: [sum ; sum_sq] -> one selector matmul ----
        rs1 = jnp.concatenate([jnp.sum(y1, axis=0, keepdims=True),
                               jnp.sum(y1 * y1, axis=0, keepdims=True)], axis=0)  # (2, OW1*C1)
        st1 = jnp.dot(rs1, s1_ref[...], preferred_element_type=f32) * (1.0 / N1)  # (2, C1)
        mean1 = st1[0:1, :]
        var1 = jnp.maximum(st1[1:2, :] - mean1 * mean1, 0.0)
        inv1 = jax.lax.rsqrt(var1 + EPS)
        a1 = g1_ref[...] * inv1
        b1 = be1_ref[...] - a1 * mean1
        ab1 = jnp.concatenate([a1, b1], axis=0)                                    # (2, C1)
        ab1_l = jnp.dot(ab1, s1t_ref[...], preferred_element_type=f32)             # (2, OW1*C1)

        # ---- BN1 + ReLU + 2x2/stride-2 maxpool (selector matmuls, batch-stacked) ----
        z = jnp.maximum(y1 * ab1_l[0:1, :] + ab1_l[1:2, :], 0.0)                   # (B*OH1, OW1*C1)
        zw = jnp.maximum(jnp.dot(z, e1_ref[...], preferred_element_type=f32),
                         jnp.dot(z, o1_ref[...], preferred_element_type=f32))      # (B*OH1, PW1*C1)
        zp = jnp.maximum(jnp.dot(pe_ref[...], zw, preferred_element_type=f32),
                         jnp.dot(po_ref[...], zw, preferred_element_type=f32))     # (B*PH1, PW1*C1)

        # ---- conv2: one bf16 MXU matmul (batch + C1 + KH in the contraction) ----
        slabs2 = []
        for bi in range(B):
            p_b = zp[bi * PH1:(bi + 1) * PH1, :]                   # (PH1, PW1*C1)
            slabs2.append(jnp.concatenate(
                [p_b[kh:kh + OH2, :] for kh in range(KH)], axis=-1))   # (OH2, KH*PW1*C1)
        lhs2 = jnp.concatenate(slabs2, axis=0).astype(bf16)        # (B*OH2, KH*PW1*C1)
        y2 = jnp.dot(lhs2, k2_ref[...], preferred_element_type=f32)   # (B*OH2, OW2*C2)

        # ---- BN2 stats, single pass ----
        rs2 = jnp.concatenate([jnp.sum(y2, axis=0, keepdims=True),
                               jnp.sum(y2 * y2, axis=0, keepdims=True)], axis=0)
        st2 = jnp.dot(rs2, s2_ref[...], preferred_element_type=f32) * (1.0 / N2)   # (2, C2)
        mean2 = st2[0:1, :]
        var2 = jnp.maximum(st2[1:2, :] - mean2 * mean2, 0.0)
        inv2 = jax.lax.rsqrt(var2 + EPS)
        a2 = g2_ref[...] * inv2
        b2 = be2_ref[...] - a2 * mean2
        ab2 = jnp.concatenate([a2, b2], axis=0)
        ab2_l = jnp.dot(ab2, s2t_ref[...], preferred_element_type=f32)             # (2, OW2*C2)

        # ---- BN2 + ReLU, batched spatial mean, merged FC heads ----
        yr = jnp.maximum(y2 * ab2_l[0:1, :] + ab2_l[1:2, :], 0.0)                  # (B*OH2, OW2*C2)
        bsum = jnp.dot(bs_ref[...], yr, preferred_element_type=f32)                # (B, OW2*C2)
        feats = jnp.dot(bsum, s2_ref[...],
                        preferred_element_type=f32) * (1.0 / float(OH2 * OW2))     # (B, C2)
        head = jnp.dot(feats, wh_ref[...], preferred_element_type=f32) + bh_ref[...]
        head_ref[...] = head                                                       # (B, NLOG+1)

    def forward(x1, x2):
        # diff + NCHW -> (B, H, W*Cin) lane-interleaving: pure layout plumbing,
        # fused into one cheap XLA op ahead of the pallas_call.
        xd = jnp.transpose(x2 - x1, (0, 2, 3, 1)).reshape(B, H, W * Cin)
        in_specs = ([_full_spec((B, H, W * Cin))]
                    + [_full_spec(a.shape) for a in in_arrays])
        head = pl.pallas_call(
            kernel,
            out_shape=jax.ShapeDtypeStruct((B, NLOG + 1), jnp.float32),
            grid=(1,),
            in_specs=in_specs,
            out_specs=_full_spec((B, NLOG + 1)),
            compiler_params=pltpu.CompilerParams(
                dimension_semantics=("arbitrary",)),
        )(xd, *in_arrays)
        return head[:, :NLOG], head[:, NLOG]

    return jax.jit(forward)


# ----------------------------------------------------------------------------
# pure-JAX reference (mirrors the PyTorch module, training-mode BN)
# ----------------------------------------------------------------------------
def reference_forward(params, x1, x2):
    x = x2 - x1

    def conv(h, w):
        return jax.lax.conv_general_dilated(
            h, w, (1, 1), "VALID", dimension_numbers=("NCHW", "OIHW", "NCHW"))

    def bn_relu(h, g, b):
        mean = jnp.mean(h, axis=(0, 2, 3), keepdims=True)
        var = jnp.mean((h - mean) ** 2, axis=(0, 2, 3), keepdims=True)
        hn = (h - mean) * jax.lax.rsqrt(var + 1e-5)
        return jnp.maximum(hn * g.reshape(1, -1, 1, 1) + b.reshape(1, -1, 1, 1), 0.0)

    h = conv(x, params["c1_w"]) + params["c1_b"].reshape(1, -1, 1, 1)
    h = bn_relu(h, params["bn1_g"], params["bn1_b"])
    Bn, Cn, Hn, Wn = h.shape
    h = h[:, :, :Hn // 2 * 2, :Wn // 2 * 2].reshape(
        Bn, Cn, Hn // 2, 2, Wn // 2, 2).max(axis=(3, 5))
    h = conv(h, params["c2_w"]) + params["c2_b"].reshape(1, -1, 1, 1)
    h = bn_relu(h, params["bn2_g"], params["bn2_b"])
    feat = h.mean(axis=(2, 3))
    logits = feat @ params["l_w"] + params["l_b"]
    shift = feat @ params["s_w"] + params["s_b"]
    return logits, jnp.squeeze(shift)


if __name__ == "__main__":
    dim = (4, 2)                 # np.prod(dim) = 8 logits
    channels, width = 3, 2
    batch, spatial = 2, 32

    key = jax.random.PRNGKey(0)
    k1, k2, kp = jax.random.split(key, 3)
    x1 = jax.random.normal(k1, (batch, channels, spatial, spatial), jnp.float32)
    x2 = jax.random.normal(k2, (batch, channels, spatial, spatial), jnp.float32)
    params = init_params(kp, dim, channels=channels, width=width)

    fwd = make_forward(params, dim, channels=channels, width=width,
                       batch=batch, spatial=spatial)
    logits, shift = fwd(x1, x2)
    jax.block_until_ready((logits, shift))

    n_logits = int(np.prod(dim))
    assert logits.shape == (batch, n_logits), logits.shape
    assert shift.shape == (batch,), shift.shape
    assert bool(jnp.all(jnp.isfinite(logits))) and bool(jnp.all(jnp.isfinite(shift)))

    # sanity check against the pure-JAX f32 reference; tolerance covers the bf16
    # weight/activation cast on the conv matmuls plus accumulation-order differences.
    ref_logits, ref_shift = reference_forward(params, x1, x2)
    assert bool(jnp.allclose(logits, ref_logits, atol=5e-2, rtol=5e-2)), (
        float(jnp.max(jnp.abs(logits - ref_logits))))
    assert bool(jnp.allclose(shift, ref_shift, atol=5e-2, rtol=5e-2)), (
        float(jnp.max(jnp.abs(shift - ref_shift))))

    print("KERNEL_OK")
</pallas_src>

<mosaic_0001>
module attributes {stable_mosaic.version = 11 : i64} {
  func.func @kernel(%arg0: i32, %arg1: memref<2x32x96xf32, #tpu.memory_space<vmem>>, %arg2: memref<480x168xbf16, #tpu.memory_space<vmem>>, %arg3: memref<168x6xf32, #tpu.memory_space<vmem>>, %arg4: memref<6x168xf32, #tpu.memory_space<vmem>>, %arg5: memref<1x6xf32, #tpu.memory_space<vmem>>, %arg6: memref<1x6xf32, #tpu.memory_space<vmem>>, %arg7: memref<168x84xf32, #tpu.memory_space<vmem>>, %arg8: memref<168x84xf32, #tpu.memory_space<vmem>>, %arg9: memref<28x56xf32, #tpu.memory_space<vmem>>, %arg10: memref<28x56xf32, #tpu.memory_space<vmem>>, %arg11: memref<420x160xbf16, #tpu.memory_space<vmem>>, %arg12: memref<160x16xf32, #tpu.memory_space<vmem>>, %arg13: memref<16x160xf32, #tpu.memory_space<vmem>>, %arg14: memref<1x16xf32, #tpu.memory_space<vmem>>, %arg15: memref<1x16xf32, #tpu.memory_space<vmem>>, %arg16: memref<2x20xf32, #tpu.memory_space<vmem>>, %arg17: memref<16x9xf32, #tpu.memory_space<vmem>>, %arg18: memref<1x9xf32, #tpu.memory_space<vmem>>, %arg19: memref<2x9xf32, #tpu.memory_space<vmem>>) attributes {dimension_semantics = [#tpu.dimension_semantics<arbitrary>], iteration_bounds = array<i64: 1>, scalar_prefetch = 0 : i64, scratch_operands = 0 : i64, tpu.core_type = #tpu.core_type<tc>, window_params = [{pipeline_mode = #tpu.pipeline_mode<synchronous>, transform_indices = @transform_0, window_bounds = array<i64: 2, 32, 96>}, {pipeline_mode = #tpu.pipeline_mode<synchronous>, transform_indices = @transform_1, window_bounds = array<i64: 480, 168>}, {pipeline_mode = #tpu.pipeline_mode<synchronous>, transform_indices = @transform_2, window_bounds = array<i64: 168, 6>}, {pipeline_mode = #tpu.pipeline_mode<synchronous>, transform_indices = @transform_3, window_bounds = array<i64: 6, 168>}, {pipeline_mode = #tpu.pipeline_mode<synchronous>, transform_indices = @transform_4, window_bounds = array<i64: 1, 6>}, {pipeline_mode = #tpu.pipeline_mode<synchronous>, transform_indices = @transform_5, window_bounds = array<i64: 1, 6>}, {pipeline_mode = #tpu.pipeline_mode<synchronous>, transform_indices = @transform_6, window_bounds = array<i64: 168, 84>}, {pipeline_mode = #tpu.pipeline_mode<synchronous>, transform_indices = @transform_7, window_bounds = array<i64: 168, 84>}, {pipeline_mode = #tpu.pipeline_mode<synchronous>, transform_indices = @transform_8, window_bounds = array<i64: 28, 56>}, {pipeline_mode = #tpu.pipeline_mode<synchronous>, transform_indices = @transform_9, window_bounds = array<i64: 28, 56>}, {pipeline_mode = #tpu.pipeline_mode<synchronous>, transform_indices = @transform_10, window_bounds = array<i64: 420, 160>}, {pipeline_mode = #tpu.pipeline_mode<synchronous>, transform_indices = @transform_11, window_bounds = array<i64: 160, 16>}, {pipeline_mode = #tpu.pipeline_mode<synchronous>, transform_indices = @transform_12, window_bounds = array<i64: 16, 160>}, {pipeline_mode = #tpu.pipeline_mode<synchronous>, transform_indices = @transform_13, window_bounds = array<i64: 1, 16>}, {pipeline_mode = #tpu.pipeline_mode<synchronous>, transform_indices = @transform_14, window_bounds = array<i64: 1, 16>}, {pipeline_mode = #tpu.pipeline_mode<synchronous>, transform_indices = @transform_15, window_bounds = array<i64: 2, 20>}, {pipeline_mode = #tpu.pipeline_mode<synchronous>, transform_indices = @transform_16, window_bounds = array<i64: 16, 9>}, {pipeline_mode = #tpu.pipeline_mode<synchronous>, transform_indices = @transform_17, window_bounds = array<i64: 1, 9>}, {pipeline_mode = #tpu.pipeline_mode<synchronous>, transform_indices = @transform_18, window_bounds = array<i64: 2, 9>}]} {
    %c0 = arith.constant 0 : index
    %c0_0 = arith.constant 0 : index
    %c0_1 = arith.constant 0 : index
    %0 = vector.load %arg1[%c0, %c0_0, %c0_1] : memref<2x32x96xf32, #tpu.memory_space<vmem>>, vector<1x32x96xf32>
    %1 = vector.shape_cast %0 : vector<1x32x96xf32> to vector<32x96xf32>
    %2 = vector.extract_strided_slice %1 {offsets = [0, 0], sizes = [28, 96], strides = [1, 1]} : vector<32x96xf32> to vector<28x96xf32>
    %3 = vector.extract_strided_slice %1 {offsets = [1, 0], sizes = [28, 96], strides = [1, 1]} : vector<32x96xf32> to vector<28x96xf32>
    %4 = vector.extract_strided_slice %1 {offsets = [2, 0], sizes = [28, 96], strides = [1, 1]} : vector<32x96xf32> to vector<28x96xf32>
    %5 = vector.extract_strided_slice %1 {offsets = [3, 0], sizes = [28, 96], strides = [1, 1]} : vector<32x96xf32> to vector<28x96xf32>
    %6 = vector.extract_strided_slice %1 {offsets = [4, 0], sizes = [28, 96], strides = [1, 1]} : vector<32x96xf32> to vector<28x96xf32>
    %7 = tpu.concatenate %2, %3, %4, %5, %6 in 1 : vector<28x96xf32>, vector<28x96xf32>, vector<28x96xf32>, vector<28x96xf32>, vector<28x96xf32> -> vector<28x480xf32>
    %c1 = arith.constant 1 : index
    %c0_2 = arith.constant 0 : index
    %c0_3 = arith.constant 0 : index
    %8 = vector.load %arg1[%c1, %c0_2, %c0_3] : memref<2x32x96xf32, #tpu.memory_space<vmem>>, vector<1x32x96xf32>
    %9 = vector.shape_cast %8 : vector<1x32x96xf32> to vector<32x96xf32>
    %10 = vector.extract_strided_slice %9 {offsets = [0, 0], sizes = [28, 96], strides = [1, 1]} : vector<32x96xf32> to vector<28x96xf32>
    %11 = vector.extract_strided_slice %9 {offsets = [1, 0], sizes = [28, 96], strides = [1, 1]} : vector<32x96xf32> to vector<28x96xf32>
    %12 = vector.extract_strided_slice %9 {offsets = [2, 0], sizes = [28, 96], strides = [1, 1]} : vector<32x96xf32> to vector<28x96xf32>
    %13 = vector.extract_strided_slice %9 {offsets = [3, 0], sizes = [28, 96], strides = [1, 1]} : vector<32x96xf32> to vector<28x96xf32>
    %14 = vector.extract_strided_slice %9 {offsets = [4, 0], sizes = [28, 96], strides = [1, 1]} : vector<32x96xf32> to vector<28x96xf32>
    %15 = tpu.concatenate %10, %11, %12, %13, %14 in 1 : vector<28x96xf32>, vector<28x96xf32>, vector<28x96xf32>, vector<28x96xf32>, vector<28x96xf32> -> vector<28x480xf32>
    %16 = tpu.concatenate %7, %15 in 0 : vector<28x480xf32>, vector<28x480xf32> -> vector<56x480xf32>
    %17 = arith.truncf %16 : vector<56x480xf32> to vector<56x480xbf16>
    %c0_4 = arith.constant 0 : index
    %c0_5 = arith.constant 0 : index
    %18 = vector.load %arg2[%c0_4, %c0_5] : memref<480x168xbf16, #tpu.memory_space<vmem>>, vector<480x168xbf16>
    %cst = arith.constant dense<0.000000e+00> : vector<56x168xf32>
    %19 = tpu.matmul %17, %18, %cst {dimension_numbers = #tpu.dot_dimension_numbers<[1], [0], [0], [1], [0, 0, 1, 1], [], []>} : vector<56x480xbf16>, vector<480x168xbf16>, vector<56x168xf32> -> vector<56x168xf32>
    %cst_6 = arith.constant dense<0.000000e+00> : vector<168xf32>
    %20 = vector.multi_reduction <add>, %19, %cst_6 [0] : vector<56x168xf32> to vector<168xf32>
    %21 = vector.shape_cast %20 : vector<168xf32> to vector<1x168xf32>
    %22 = arith.mulf %19, %19 : vector<56x168xf32>
    %cst_7 = arith.constant dense<0.000000e+00> : vector<168xf32>
    %23 = vector.multi_reduction <add>, %22, %cst_7 [0] : vector<56x168xf32> to vector<168xf32>
    %24 = vector.shape_cast %23 : vector<168xf32> to vector<1x168xf32>
    %25 = tpu.concatenate %21, %24 in 0 : vector<1x168xf32>, vector<1x168xf32> -> vector<2x168xf32>
    %c0_8 = arith.constant 0 : index
    %c0_9 = arith.constant 0 : index
    %26 = vector.load %arg3[%c0_8, %c0_9] : memref<168x6xf32, #tpu.memory_space<vmem>>, vector<168x6xf32>
    %cst_10 = arith.constant dense<0.000000e+00> : vector<2x6xf32>
    %27 = tpu.matmul %25, %26, %cst_10 {dimension_numbers = #tpu.dot_dimension_numbers<[1], [0], [0], [1], [0, 0, 1, 1], [], []>} : vector<2x168xf32>, vector<168x6xf32>, vector<2x6xf32> -> vector<2x6xf32>
    %cst_11 = arith.constant 6.37755089E-4 : f32
    %28 = vector.broadcast %cst_11 : f32 to vector<2x6xf32>
    %29 = arith.mulf %27, %28 : vector<2x6xf32>
    %30 = vector.extract_strided_slice %29 {offsets = [0, 0], sizes = [1, 6], strides = [1, 1]} : vector<2x6xf32> to vector<1x6xf32>
    %31 = vector.extract_strided_slice %29 {offsets = [1, 0], sizes = [1, 6], strides = [1, 1]} : vector<2x6xf32> to vector<1x6xf32>
    %32 = arith.mulf %30, %30 : vector<1x6xf32>
    %33 = arith.subf %31, %32 : vector<1x6xf32>
    %cst_12 = arith.constant 0.000000e+00 : f32
    %34 = vector.broadcast %cst_12 : f32 to vector<1x6xf32>
    %35 = arith.maximumf %33, %34 : vector<1x6xf32>
    %cst_13 = arith.constant 9.99999974E-6 : f32
    %36 = vector.broadcast %cst_13 : f32 to vector<1x6xf32>
    %37 = arith.addf %35, %36 : vector<1x6xf32>
    %38 = math.rsqrt %37 : vector<1x6xf32>
    %c0_14 = arith.constant 0 : index
    %c0_15 = arith.constant 0 : index
    %39 = vector.load %arg5[%c0_14, %c0_15] : memref<1x6xf32, #tpu.memory_space<vmem>>, vector<1x6xf32>
    %40 = arith.mulf %39, %38 : vector<1x6xf32>
    %c0_16 = arith.constant 0 : index
    %c0_17 = arith.constant 0 : index
    %41 = vector.load %arg6[%c0_16, %c0_17] : memref<1x6xf32, #tpu.memory_space<vmem>>, vector<1x6xf32>
    %42 = arith.mulf %40, %30 : vector<1x6xf32>
    %43 = arith.subf %41, %42 : vector<1x6xf32>
    %44 = tpu.concatenate %40, %43 in 0 : vector<1x6xf32>, vector<1x6xf32> -> vector<2x6xf32>
    %c0_18 = arith.constant 0 : index
    %c0_19 = arith.constant 0 : index
    %45 = vector.load %arg4[%c0_18, %c0_19] : memref<6x168xf32, #tpu.memory_space<vmem>>, vector<6x168xf32>
    %cst_20 = arith.constant dense<0.000000e+00> : vector<2x168xf32>
    %46 = tpu.matmul %44, %45, %cst_20 {dimension_numbers = #tpu.dot_dimension_numbers<[1], [0], [0], [1], [0, 0, 1, 1], [], []>} : vector<2x6xf32>, vector<6x168xf32>, vector<2x168xf32> -> vector<2x168xf32>
    %47 = vector.extract_strided_slice %46 {offsets = [0, 0], sizes = [1, 168], strides = [1, 1]} : vector<2x168xf32> to vector<1x168xf32>
    %48 = vector.broadcast %47 : vector<1x168xf32> to vector<56x168xf32>
    %49 = arith.mulf %19, %48 : vector<56x168xf32>
    %50 = vector.extract_strided_slice %46 {offsets = [1, 0], sizes = [1, 168], strides = [1, 1]} : vector<2x168xf32> to vector<1x168xf32>
    %51 = vector.broadcast %50 : vector<1x168xf32> to vector<56x168xf32>
    %52 = arith.addf %49, %51 : vector<56x168xf32>
    %cst_21 = arith.constant 0.000000e+00 : f32
    %53 = vector.broadcast %cst_21 : f32 to vector<56x168xf32>
    %54 = arith.maximumf %52, %53 : vector<56x168xf32>
    %c0_22 = arith.constant 0 : index
    %c0_23 = arith.constant 0 : index
    %55 = vector.load %arg7[%c0_22, %c0_23] : memref<168x84xf32, #tpu.memory_space<vmem>>, vector<168x84xf32>
    %cst_24 = arith.constant dense<0.000000e+00> : vector<56x84xf32>
    %56 = tpu.matmul %54, %55, %cst_24 {dimension_numbers = #tpu.dot_dimension_numbers<[1], [0], [0], [1], [0, 0, 1, 1], [], []>} : vector<56x168xf32>, vector<168x84xf32>, vector<56x84xf32> -> vector<56x84xf32>
    %c0_25 = arith.constant 0 : index
    %c0_26 = arith.constant 0 : index
    %57 = vector.load %arg8[%c0_25, %c0_26] : memref<168x84xf32, #tpu.memory_space<vmem>>, vector<168x84xf32>
    %cst_27 = arith.constant dense<0.000000e+00> : vector<56x84xf32>
    %58 = tpu.matmul %54, %57, %cst_27 {dimension_numbers = #tpu.dot_dimension_numbers<[1], [0], [0], [1], [0, 0, 1, 1], [], []>} : vector<56x168xf32>, vector<168x84xf32>, vector<56x84xf32> -> vector<56x84xf32>
    %59 = arith.maximumf %56, %58 : vector<56x84xf32>
    %c0_28 = arith.constant 0 : index
    %c0_29 = arith.constant 0 : index
    %60 = vector.load %arg9[%c0_28, %c0_29] : memref<28x56xf32, #tpu.memory_space<vmem>>, vector<28x56xf32>
    %cst_30 = arith.constant dense<0.000000e+00> : vector<28x84xf32>
    %61 = tpu.matmul %60, %59, %cst_30 {dimension_numbers = #tpu.dot_dimension_numbers<[1], [0], [0], [1], [0, 0, 1, 1], [], []>} : vector<28x56xf32>, vector<56x84xf32>, vector<28x84xf32> -> vector<28x84xf32>
    %c0_31 = arith.constant 0 : index
    %c0_32 = arith.constant 0 : index
    %62 = vector.load %arg10[%c0_31, %c0_32] : memref<28x56xf32, #tpu.memory_space<vmem>>, vector<28x56xf32>
    %cst_33 = arith.constant dense<0.000000e+00> : vector<28x84xf32>
    %63 = tpu.matmul %62, %59, %cst_33 {dimension_numbers = #tpu.dot_dimension_numbers<[1], [0], [0], [1], [0, 0, 1, 1], [], []>} : vector<28x56xf32>, vector<56x84xf32>, vector<28x84xf32> -> vector<28x84xf32>
    %64 = arith.maximumf %61, %63 : vector<28x84xf32>
    %65 = vector.extract_strided_slice %64 {offsets = [0, 0], sizes = [14, 84], strides = [1, 1]} : vector<28x84xf32> to vector<14x84xf32>
    %66 = vector.extract_strided_slice %65 {offsets = [0, 0], sizes = [10, 84], strides = [1, 1]} : vector<14x84xf32> to vector<10x84xf32>
    %67 = vector.extract_strided_slice %65 {offsets = [1, 0], sizes = [10, 84], strides = [1, 1]} : vector<14x84xf32> to vector<10x84xf32>
    %68 = vector.extract_strided_slice %65 {offsets = [2, 0], sizes = [10, 84], strides = [1, 1]} : vector<14x84xf32> to vector<10x84xf32>
    %69 = vector.extract_strided_slice %65 {offsets = [3, 0], sizes = [10, 84], strides = [1, 1]} : vector<14x84xf32> to vector<10x84xf32>
    %70 = vector.extract_strided_slice %65 {offsets = [4, 0], sizes = [10, 84], strides = [1, 1]} : vector<14x84xf32> to vector<10x84xf32>
    %71 = tpu.concatenate %66, %67, %68, %69, %70 in 1 : vector<10x84xf32>, vector<10x84xf32>, vector<10x84xf32>, vector<10x84xf32>, vector<10x84xf32> -> vector<10x420xf32>
    %72 = vector.extract_strided_slice %64 {offsets = [14, 0], sizes = [14, 84], strides = [1, 1]} : vector<28x84xf32> to vector<14x84xf32>
    %73 = vector.extract_strided_slice %72 {offsets = [0, 0], sizes = [10, 84], strides = [1, 1]} : vector<14x84xf32> to vector<10x84xf32>
    %74 = vector.extract_strided_slice %72 {offsets = [1, 0], sizes = [10, 84], strides = [1, 1]} : vector<14x84xf32> to vector<10x84xf32>
    %75 = vector.extract_strided_slice %72 {offsets = [2, 0], sizes = [10, 84], strides = [1, 1]} : vector<14x84xf32> to vector<10x84xf32>
    %76 = vector.extract_strided_slice %72 {offsets = [3, 0], sizes = [10, 84], strides = [1, 1]} : vector<14x84xf32> to vector<10x84xf32>
    %77 = vector.extract_strided_slice %72 {offsets = [4, 0], sizes = [10, 84], strides = [1, 1]} : vector<14x84xf32> to vector<10x84xf32>
    %78 = tpu.concatenate %73, %74, %75, %76, %77 in 1 : vector<10x84xf32>, vector<10x84xf32>, vector<10x84xf32>, vector<10x84xf32>, vector<10x84xf32> -> vector<10x420xf32>
    %79 = tpu.concatenate %71, %78 in 0 : vector<10x420xf32>, vector<10x420xf32> -> vector<20x420xf32>
    %80 = arith.truncf %79 : vector<20x420xf32> to vector<20x420xbf16>
    %c0_34 = arith.constant 0 : index
    %c0_35 = arith.constant 0 : index
    %81 = vector.load %arg11[%c0_34, %c0_35] : memref<420x160xbf16, #tpu.memory_space<vmem>>, vector<420x160xbf16>
    %cst_36 = arith.constant dense<0.000000e+00> : vector<20x160xf32>
    %82 = tpu.matmul %80, %81, %cst_36 {dimension_numbers = #tpu.dot_dimension_numbers<[1], [0], [0], [1], [0, 0, 1, 1], [], []>} : vector<20x420xbf16>, vector<420x160xbf16>, vector<20x160xf32> -> vector<20x160xf32>
    %cst_37 = arith.constant dense<0.000000e+00> : vector<160xf32>
    %83 = vector.multi_reduction <add>, %82, %cst_37 [0] : vector<20x160xf32> to vector<160xf32>
    %84 = vector.shape_cast %83 : vector<160xf32> to vector<1x160xf32>
    %85 = arith.mulf %82, %82 : vector<20x160xf32>
    %cst_38 = arith.constant dense<0.000000e+00> : vector<160xf32>
    %86 = vector.multi_reduction <add>, %85, %cst_38 [0] : vector<20x160xf32> to vector<160xf32>
    %87 = vector.shape_cast %86 : vector<160xf32> to vector<1x160xf32>
    %88 = tpu.concatenate %84, %87 in 0 : vector<1x160xf32>, vector<1x160xf32> -> vector<2x160xf32>
    %c0_39 = arith.constant 0 : index
    %c0_40 = arith.constant 0 : index
    %89 = vector.load %arg12[%c0_39, %c0_40] : memref<160x16xf32, #tpu.memory_space<vmem>>, vector<160x16xf32>
    %cst_41 = arith.constant dense<0.000000e+00> : vector<2x16xf32>
    %90 = tpu.matmul %88, %89, %cst_41 {dimension_numbers = #tpu.dot_dimension_numbers<[1], [0], [0], [1], [0, 0, 1, 1], [], []>} : vector<2x160xf32>, vector<160x16xf32>, vector<2x16xf32> -> vector<2x16xf32>
    %cst_42 = arith.constant 5.000000e-03 : f32
    %91 = vector.broadcast %cst_42 : f32 to vector<2x16xf32>
    %92 = arith.mulf %90, %91 : vector<2x16xf32>
    %93 = vector.extract_strided_slice %92 {offsets = [0, 0], sizes = [1, 16], strides = [1, 1]} : vector<2x16xf32> to vector<1x16xf32>
    %94 = vector.extract_strided_slice %92 {offsets = [1, 0], sizes = [1, 16], strides = [1, 1]} : vector<2x16xf32> to vector<1x16xf32>
    %95 = arith.mulf %93, %93 : vector<1x16xf32>
    %96 = arith.subf %94, %95 : vector<1x16xf32>
    %cst_43 = arith.constant 0.000000e+00 : f32
    %97 = vector.broadcast %cst_43 : f32 to vector<1x16xf32>
    %98 = arith.maximumf %96, %97 : vector<1x16xf32>
    %cst_44 = arith.constant 9.99999974E-6 : f32
    %99 = vector.broadcast %cst_44 : f32 to vector<1x16xf32>
    %100 = arith.addf %98, %99 : vector<1x16xf32>
    %101 = math.rsqrt %100 : vector<1x16xf32>
    %c0_45 = arith.constant 0 : index
    %c0_46 = arith.constant 0 : index
    %102 = vector.load %arg14[%c0_45, %c0_46] : memref<1x16xf32, #tpu.memory_space<vmem>>, vector<1x16xf32>
    %103 = arith.mulf %102, %101 : vector<1x16xf32>
    %c0_47 = arith.constant 0 : index
    %c0_48 = arith.constant 0 : index
    %104 = vector.load %arg15[%c0_47, %c0_48] : memref<1x16xf32, #tpu.memory_space<vmem>>, vector<1x16xf32>
    %105 = arith.mulf %103, %93 : vector<1x16xf32>
    %106 = arith.subf %104, %105 : vector<1x16xf32>
    %107 = tpu.concatenate %103, %106 in 0 : vector<1x16xf32>, vector<1x16xf32> -> vector<2x16xf32>
    %c0_49 = arith.constant 0 : index
    %c0_50 = arith.constant 0 : index
    %108 = vector.load %arg13[%c0_49, %c0_50] : memref<16x160xf32, #tpu.memory_space<vmem>>, vector<16x160xf32>
    %cst_51 = arith.constant dense<0.000000e+00> : vector<2x160xf32>
    %109 = tpu.matmul %107, %108, %cst_51 {dimension_numbers = #tpu.dot_dimension_numbers<[1], [0], [0], [1], [0, 0, 1, 1], [], []>} : vector<2x16xf32>, vector<16x160xf32>, vector<2x160xf32> -> vector<2x160xf32>
    %110 = vector.extract_strided_slice %109 {offsets = [0, 0], sizes = [1, 160], strides = [1, 1]} : vector<2x160xf32> to vector<1x160xf32>
    %111 = vector.broadcast %110 : vector<1x160xf32> to vector<20x160xf32>
    %112 = arith.mulf %82, %111 : vector<20x160xf32>
    %113 = vector.extract_strided_slice %109 {offsets = [1, 0], sizes = [1, 160], strides = [1, 1]} : vector<2x160xf32> to vector<1x160xf32>
    %114 = vector.broadcast %113 : vector<1x160xf32> to vector<20x160xf32>
    %115 = arith.addf %112, %114 : vector<20x160xf32>
    %cst_52 = arith.constant 0.000000e+00 : f32
    %116 = vector.broadcast %cst_52 : f32 to vector<20x160xf32>
    %117 = arith.maximumf %115, %116 : vector<20x160xf32>
    %c0_53 = arith.constant 0 : index
    %c0_54 = arith.constant 0 : index
    %118 = vector.load %arg16[%c0_53, %c0_54] : memref<2x20xf32, #tpu.memory_space<vmem>>, vector<2x20xf32>
    %cst_55 = arith.constant dense<0.000000e+00> : vector<2x160xf32>
    %119 = tpu.matmul %118, %117, %cst_55 {dimension_numbers = #tpu.dot_dimension_numbers<[1], [0], [0], [1], [0, 0, 1, 1], [], []>} : vector<2x20xf32>, vector<20x160xf32>, vector<2x160xf32> -> vector<2x160xf32>
    %c0_56 = arith.constant 0 : index
    %c0_57 = arith.constant 0 : index
    %120 = vector.load %arg12[%c0_56, %c0_57] : memref<160x16xf32, #tpu.memory_space<vmem>>, vector<160x16xf32>
    %cst_58 = arith.constant dense<0.000000e+00> : vector<2x16xf32>
    %121 = tpu.matmul %119, %120, %cst_58 {dimension_numbers = #tpu.dot_dimension_numbers<[1], [0], [0], [1], [0, 0, 1, 1], [], []>} : vector<2x160xf32>, vector<160x16xf32>, vector<2x16xf32> -> vector<2x16xf32>
    %cst_59 = arith.constant 0.00999999977 : f32
    %122 = vector.broadcast %cst_59 : f32 to vector<2x16xf32>
    %123 = arith.mulf %121, %122 : vector<2x16xf32>
    %c0_60 = arith.constant 0 : index
    %c0_61 = arith.constant 0 : index
    %124 = vector.load %arg17[%c0_60, %c0_61] : memref<16x9xf32, #tpu.memory_space<vmem>>, vector<16x9xf32>
    %cst_62 = arith.constant dense<0.000000e+00> : vector<2x9xf32>
    %125 = tpu.matmul %123, %124, %cst_62 {dimension_numbers = #tpu.dot_dimension_numbers<[1], [0], [0], [1], [0, 0, 1, 1], [], []>} : vector<2x16xf32>, vector<16x9xf32>, vector<2x9xf32> -> vector<2x9xf32>
    %c0_63 = arith.constant 0 : index
    %c0_64 = arith.constant 0 : index
    %126 = vector.load %arg18[%c0_63, %c0_64] : memref<1x9xf32, #tpu.memory_space<vmem>>, vector<1x9xf32>
    %127 = vector.broadcast %126 : vector<1x9xf32> to vector<2x9xf32>
    %128 = arith.addf %125, %127 : vector<2x9xf32>
    %c0_65 = arith.constant 0 : index
    %c0_66 = arith.constant 0 : index
    %129 = vector.load %arg19[%c0_65, %c0_66] : memref<2x9xf32, #tpu.memory_space<vmem>>, vector<2x9xf32>
    tpu.vector_store %arg19[%c0_65, %c0_66], %128 {strides = array<i32>} : memref<2x9xf32, #tpu.memory_space<vmem>>, vector<2x9xf32>,
    return
  }
  func.func @transform_0(%arg0: i32) -> (i32, i32, i32) {
    %c0_i32 = arith.constant 0 : i32
    %c0_i32_0 = arith.constant 0 : i32
    %c0_i32_1 = arith.constant 0 : i32
    %c0_i32_2 = arith.constant 0 : i32
    return %c0_i32, %c0_i32_0, %c0_i32_1 : i32, i32, i32
  }
  func.func @transform_1(%arg0: i32) -> (i32, i32) {
    %c0_i32 = arith.constant 0 : i32
    %c0_i32_0 = arith.constant 0 : i32
    %c0_i32_1 = arith.constant 0 : i32
    return %c0_i32, %c0_i32_0 : i32, i32
  }
  func.func @transform_2(%arg0: i32) -> (i32, i32) {
    %c0_i32 = arith.constant 0 : i32
    %c0_i32_0 = arith.constant 0 : i32
    %c0_i32_1 = arith.constant 0 : i32
    return %c0_i32, %c0_i32_0 : i32, i32
  }
  func.func @transform_3(%arg0: i32) -> (i32, i32) {
    %c0_i32 = arith.constant 0 : i32
    %c0_i32_0 = arith.constant 0 : i32
    %c0_i32_1 = arith.constant 0 : i32
    return %c0_i32, %c0_i32_0 : i32, i32
  }
  func.func @transform_4(%arg0: i32) -> (i32, i32) {
    %c0_i32 = arith.constant 0 : i32
    %c0_i32_0 = arith.constant 0 : i32
    %c0_i32_1 = arith.constant 0 : i32
    return %c0_i32, %c0_i32_0 : i32, i32
  }
  func.func @transform_5(%arg0: i32) -> (i32, i32) {
    %c0_i32 = arith.constant 0 : i32
    %c0_i32_0 = arith.constant 0 : i32
    %c0_i32_1 = arith.constant 0 : i32
    return %c0_i32, %c0_i32_0 : i32, i32
  }
  func.func @transform_6(%arg0: i32) -> (i32, i32) {
    %c0_i32 = arith.constant 0 : i32
    %c0_i32_0 = arith.constant 0 : i32
    %c0_i32_1 = arith.constant 0 : i32
    return %c0_i32, %c0_i32_0 : i32, i32
  }
  func.func @transform_7(%arg0: i32) -> (i32, i32) {
    %c0_i32 = arith.constant 0 : i32
    %c0_i32_0 = arith.constant 0 : i32
    %c0_i32_1 = arith.constant 0 : i32
    return %c0_i32, %c0_i32_0 : i32, i32
  }
  func.func @transform_8(%arg0: i32) -> (i32, i32) {
    %c0_i32 = arith.constant 0 : i32
    %c0_i32_0 = arith.constant 0 : i32
    %c0_i32_1 = arith.constant 0 : i32
    return %c0_i32, %c0_i32_0 : i32, i32
  }
  func.func @transform_9(%arg0: i32) -> (i32, i32) {
    %c0_i32 = arith.constant 0 : i32
    %c0_i32_0 = arith.constant 0 : i32
    %c0_i32_1 = arith.constant 0 : i32
    return %c0_i32, %c0_i32_0 : i32, i32
  }
  func.func @transform_10(%arg0: i32) -> (i32, i32) {
    %c0_i32 = arith.constant 0 : i32
    %c0_i32_0 = arith.constant 0 : i32
    %c0_i32_1 = arith.constant 0 : i32
    return %c0_i32, %c0_i32_0 : i32, i32
  }
  func.func @transform_11(%arg0: i32) -> (i32, i32) {
    %c0_i32 = arith.constant 0 : i32
    %c0_i32_0 = arith.constant 0 : i32
    %c0_i32_1 = arith.constant 0 : i32
    return %c0_i32, %c0_i32_0 : i32, i32
  }
  func.func @transform_12(%arg0: i32) -> (i32, i32) {
    %c0_i32 = arith.constant 0 : i32
    %c0_i32_0 = arith.constant 0 : i32
    %c0_i32_1 = arith.constant 0 : i32
    return %c0_i32, %c0_i32_0 : i32, i32
  }
  func.func @transform_13(%arg0: i32) -> (i32, i32) {
    %c0_i32 = arith.constant 0 : i32
    %c0_i32_0 = arith.constant 0 : i32
    %c0_i32_1 = arith.constant 0 : i32
    return %c0_i32, %c0_i32_0 : i32, i32
  }
  func.func @transform_14(%arg0: i32) -> (i32, i32) {
    %c0_i32 = arith.constant 0 : i32
    %c0_i32_0 = arith.constant 0 : i32
    %c0_i32_1 = arith.constant 0 : i32
    return %c0_i32, %c0_i32_0 : i32, i32
  }
  func.func @transform_15(%arg0: i32) -> (i32, i32) {
    %c0_i32 = arith.constant 0 : i32
    %c0_i32_0 = arith.constant 0 : i32
    %c0_i32_1 = arith.constant 0 : i32
    return %c0_i32, %c0_i32_0 : i32, i32
  }
  func.func @transform_16(%arg0: i32) -> (i32, i32) {
    %c0_i32 = arith.constant 0 : i32
    %c0_i32_0 = arith.constant 0 : i32
    %c0_i32_1 = arith.constant 0 : i32
    return %c0_i32, %c0_i32_0 : i32, i32
  }
  func.func @transform_17(%arg0: i32) -> (i32, i32) {
    %c0_i32 = arith.constant 0 : i32
    %c0_i32_0 = arith.constant 0 : i32
    %c0_i32_1 = arith.constant 0 : i32
    return %c0_i32, %c0_i32_0 : i32, i32
  }
  func.func @transform_18(%arg0: i32) -> (i32, i32) {
    %c0_i32 = arith.constant 0 : i32
    %c0_i32_0 = arith.constant 0 : i32
    %c0_i32_1 = arith.constant 0 : i32
    return %c0_i32, %c0_i32_0 : i32, i32
  }
}

</mosaic_0001>

<llo_original>
// kernel: forward.1
$region0: #{forward.1}
  #allocation0 [shape = 'u32[]', space=smem, size = 0x4, offset = 0x4, fixed_abs, tag = 'smem constant byte address 0x4 - core index']
  #allocation1 [shape = 'u32[144,128]{1,0:T(1,128)}', space=vmem, size = 0x12000, scoped, tag = 'internal scratch']
  %s0 = inlined_call_operand.vmem [shape: f32[2,32,96], index: 0, kind: input, shape index: {}]
  %s1 = inlined_call_operand.vmem [shape: bf16[480,168], index: 1, kind: input, shape index: {}]
  %s2 = inlined_call_operand.vmem [shape: f32[168,6], index: 2, kind: input, shape index: {}]
  %s3 = inlined_call_operand.vmem [shape: f32[6,168], index: 3, kind: input, shape index: {}]
  %s4 = inlined_call_operand.vmem [shape: f32[1,6], index: 4, kind: input, shape index: {}]
  %s5 = inlined_call_operand.vmem [shape: f32[1,6], index: 5, kind: input, shape index: {}]
  %s6 = inlined_call_operand.hbm [shape: f32[168,84], index: 6, kind: input, shape index: {}]
  %s7 = inlined_call_operand.hbm [shape: f32[168,84], index: 7, kind: input, shape index: {}]
  %s8 = inlined_call_operand.vmem [shape: f32[28,56], index: 8, kind: input, shape index: {}]
  %s9 = inlined_call_operand.vmem [shape: f32[28,56], index: 9, kind: input, shape index: {}]
  %s10 = inlined_call_operand.vmem [shape: bf16[420,160], index: 10, kind: input, shape index: {}]
  %s11 = inlined_call_operand.hbm [shape: f32[160,16], index: 11, kind: input, shape index: {}]
  %s12 = inlined_call_operand.vmem [shape: f32[16,160], index: 12, kind: input, shape index: {}]
  %s13 = inlined_call_operand.vmem [shape: f32[1,16], index: 13, kind: input, shape index: {}]
  %s14 = inlined_call_operand.vmem [shape: f32[1,16], index: 14, kind: input, shape index: {}]
  %s15 = inlined_call_operand.vmem [shape: f32[2,20], index: 15, kind: input, shape index: {}]
  %s16 = inlined_call_operand.vmem [shape: f32[16,9], index: 16, kind: input, shape index: {}]
  %s17 = inlined_call_operand.vmem [shape: f32[1,9], index: 17, kind: input, shape index: {}]
  %s18 = inlined_call_operand.vmem [shape: f32[2,9], index: 18, kind: output, shape index: {}]
  %s19 = sld [smem:[#allocation0]]
  $region94: #{forward.1} parent=0
    _
  %s21 = ssub.s32 1, %s19
  %s22 = scalar_select 0, %s21, %s19
  $region1: #{forward.1} parent=0
    #allocation2 [shape = 'u8[86016]{0}', space=vmem, size = 0x15000, scoped, tag = 'input window, operand 6, single buffered']
    #allocation3 [shape = 's32[1]{0}', space=sflag, size = 0x4, scoped, tag = 'scoped memory for forward.1']
    #allocation4 [shape = 'u8[86016]{0}', space=vmem, size = 0x15000, scoped, tag = 'input window, operand 7, single buffered']
    #allocation5 [shape = 's32[1]{0}', space=sflag, size = 0x4, scoped, tag = 'scoped memory for forward.1']
    #allocation6 [shape = 'u8[81920]{0}', space=vmem, size = 0x14000, scoped, tag = 'input window, operand 11, single buffered']
    %23 = vsyncpa [#allocation3], 0
    %24 = vsyncpa [#allocation5], 0
    // Predicated region
    $region2: #{forward.1} parent=1 // pred_check
      _
    $region3: #{forward.1} parent=1 // pred_check_branch
      %26 = sbr.rel (0) target = $region5
    $region4: #{forward.1} parent=1 // pred_region
      _
    $region5: #{forward.1} parent=1 // pred_fallthru
      _
    // Predicated region
    $region6: #{forward.1} parent=1 // pred_check
      _
    $region7: #{forward.1} parent=1 // pred_check_branch
      %28 = sbr.rel (0) target = $region9
    $region8: #{forward.1} parent=1 // pred_region
      _
    $region9: #{forward.1} parent=1 // pred_fallthru
      _
    // Predicated region
    $region10: #{forward.1} parent=1 // pred_check
      _
    $region11: #{forward.1} parent=1 // pred_check_branch
      %30 = sbr.rel (0) target = $region13
    $region12: #{forward.1} parent=1 // pred_region
      _
    $region13: #{forward.1} parent=1 // pred_fallthru
      _
    // Predicated region
    $region14: #{forward.1} parent=1 // pred_check
      _
    $region15: #{forward.1} parent=1 // pred_check_branch
      %32 = sbr.rel (0) target = $region17
    $region16: #{forward.1} parent=1 // pred_region
      _
    $region17: #{forward.1} parent=1 // pred_fallthru
      _
    // Predicated region
    $region18: #{forward.1} parent=1 // pred_check
      _
    $region19: #{forward.1} parent=1 // pred_check_branch
      %34 = sbr.rel (0) target = $region21
    $region20: #{forward.1} parent=1 // pred_region
      _
    $region21: #{forward.1} parent=1 // pred_fallthru
      _
    // Predicated region
    $region22: #{forward.1} parent=1 // pred_check
      _
    $region23: #{forward.1} parent=1 // pred_check_branch
      %36 = sbr.rel (0) target = $region25
    $region24: #{forward.1} parent=1 // pred_region
      _
    $region25: #{forward.1} parent=1 // pred_fallthru
      _
    // Predicated region
    $region26: #{forward.1} parent=1 // pred_check
      _
    $region27: #{forward.1} parent=1 // pred_check_branch
      %38 = sbr.rel (0) target = $region29
    $region28: #{forward.1} parent=1 // pred_region
      %s40 = ssub.s32 2688, 2688
      %41 = vsyncadd [#allocation3], %s40
      %s42 = sshll.u32 [#allocation2], 4
      %s43 = int_to_ptr.vmem [resolvable:$true] %s42
      %48 = dma.hbm_to_vmem [thread:$0]  %s6, 2688, %s43, [#allocation3], 128, 128, 8
    $region29: #{forward.1} parent=1 // pred_fallthru
      _
    // Predicated region
    $region30: #{forward.1} parent=1 // pred_check
      _
    $region31: #{forward.1} parent=1 // pred_check_branch
      %50 = sbr.rel (0) target = $region33
    $region32: #{forward.1} parent=1 // pred_region
      %s52 = ssub.s32 2688, 2688
      %53 = vsyncadd [#allocation5], %s52
      %s54 = sshll.u32 [#allocation4], 4
      %s55 = int_to_ptr.vmem [resolvable:$true] %s54
      %60 = dma.hbm_to_vmem [thread:$0]  %s7, 2688, %s55, [#allocation5], 128, 128, 8
    $region33: #{forward.1} parent=1 // pred_fallthru
      _
    // Predicated region
    $region34: #{forward.1} parent=1 // pred_check
      _
    $region35: #{forward.1} parent=1 // pred_check_branch
      %62 = sbr.rel (0) target = $region37
    $region36: #{forward.1} parent=1 // pred_region
      _
    $region37: #{forward.1} parent=1 // pred_fallthru
      _
    // Predicated region
    $region38: #{forward.1} parent=1 // pred_check
      _
    $region39: #{forward.1} parent=1 // pred_check_branch
      %64 = sbr.rel (0) target = $region41
    $region40: #{forward.1} parent=1 // pred_region
      _
    $region41: #{forward.1} parent=1 // pred_fallthru
      _
    // Predicated region
    $region42: #{forward.1} parent=1 // pred_check
      _
    $region43: #{forward.1} parent=1 // pred_check_branch
      %66 = sbr.rel (0) target = $region45
    $region44: #{forward.1} parent=1 // pred_region
      _
    $region45: #{forward.1} parent=1 // pred_fallthru
      _
    // Predicated region
    $region46: #{forward.1} parent=1 // pred_check
      _
    $region47: #{forward.1} parent=1 // pred_check_branch
      %68 = sbr.rel (0) target = $region49
    $region48: #{forward.1} parent=1 // pred_region
      %s70 = ssub.s32 2560, 2560
      %71 = vsyncadd [#allocation5], %s70
      %s72 = sshll.u32 [#allocation6], 4
      %s73 = int_to_ptr.vmem [resolvable:$true] %s72
      %78 = dma.hbm_to_vmem [thread:$0]  %s11, 2560, %s73, [#allocation5], 128, 128, 8
    $region49: #{forward.1} parent=1 // pred_fallthru
      _
    // Predicated region
    $region50: #{forward.1} parent=1 // pred_check
      _
    $region51: #{forward.1} parent=1 // pred_check_branch
      %80 = sbr.rel (0) target = $region53
    $region52: #{forward.1} parent=1 // pred_region
      _
    $region53: #{forward.1} parent=1 // pred_fallthru
      _
    // Predicated region
    $region54: #{forward.1} parent=1 // pred_check
      _
    $region55: #{forward.1} parent=1 // pred_check_branch
      %82 = sbr.rel (0) target = $region57
    $region56: #{forward.1} parent=1 // pred_region
      _
    $region57: #{forward.1} parent=1 // pred_fallthru
      _
    // Predicated region
    $region58: #{forward.1} parent=1 // pred_check
      _
    $region59: #{forward.1} parent=1 // pred_check_branch
      %84 = sbr.rel (0) target = $region61
    $region60: #{forward.1} parent=1 // pred_region
      _
    $region61: #{forward.1} parent=1 // pred_fallthru
      _
    // Predicated region
    $region62: #{forward.1} parent=1 // pred_check
      _
    $region63: #{forward.1} parent=1 // pred_check_branch
      %86 = sbr.rel (0) target = $region65
    $region64: #{forward.1} parent=1 // pred_region
      _
    $region65: #{forward.1} parent=1 // pred_fallthru
      _
    // Predicated region
    $region66: #{forward.1} parent=1 // pred_check
      _
    $region67: #{forward.1} parent=1 // pred_check_branch
      %88 = sbr.rel (0) target = $region69
    $region68: #{forward.1} parent=1 // pred_region
      _
    $region69: #{forward.1} parent=1 // pred_fallthru
      _
    // Predicated region
    $region70: #{forward.1} parent=1 // pred_check
      _
    $region71: #{forward.1} parent=1 // pred_check_branch
      %90 = sbr.rel (0) target = $region73
    $region72: #{forward.1} parent=1 // pred_region
      _
    $region73: #{forward.1} parent=1 // pred_fallthru
      _
    // Predicated region
    $region74: #{forward.1} parent=1 // pred_check
      _
    $region75: #{forward.1} parent=1 // pred_check_branch
      %92 = sbr.rel (0) target = $region77
    $region76: #{forward.1} parent=1 // pred_region
      %93 = dma.done [#allocation3], 2688
    $region77: #{forward.1} parent=1 // pred_fallthru
      _
    // Predicated region
    $region78: #{forward.1} parent=1 // pred_check
      _
    $region79: #{forward.1} parent=1 // pred_check_branch
      %95 = sbr.rel (0) target = $region81
    $region80: #{forward.1} parent=1 // pred_region
      %96 = dma.done [#allocation5], 2688
    $region81: #{forward.1} parent=1 // pred_fallthru
      _
    // Predicated region
    $region82: #{forward.1} parent=1 // pred_check
      _
    $region83: #{forward.1} parent=1 // pred_check_branch
      %98 = sbr.rel (0) target = $region85
    $region84: #{forward.1} parent=1 // pred_region
      %99 = dma.done [#allocation5], 2560
    $region85: #{forward.1} parent=1 // pred_fallthru
      _
    %v101 = vld [vmem:[%s0] sm:$0xff]
    %v102 = vld [vmem:[%s0 + $0x8] sm:$0xff]
    %v103 = vld [vmem:[%s0 + $0x10] sm:$0xff]
    %v104 = vld [vmem:[%s0 + $0x18] sm:$0xff]
    %vm109 = vcmask 1046528
    %v110 = vrot.slane %v101, 1
    %v111 = vrot.slane %v102, 1
    %v112 = vsel %vm109, %v110, %v111
    %v113 = vrot.slane %v103, 1
    %v114 = vsel %vm109, %v111, %v113
    %v115 = vrot.slane %v104, 1
    %v116 = vsel %vm109, %v113, %v115
    %117 = vrot.lane.b32.xlu0 %v112, 96
    %v118 = vpop.permute.xlu0 %117
    %119 = vrot.lane.b32.xlu0 %v114, 96
    %v120 = vpop.permute.xlu0 %119
    %121 = vrot.lane.b32.xlu0 %v116, 96
    %v122 = vpop.permute.xlu0 %121
    %123 = vrot.lane.b32.xlu0 %v115, 96
    %v124 = vpop.permute.xlu0 %123
    %vm129 = vcmask 1045504
    %v130 = vrot.slane %v101, 2
    %v131 = vrot.slane %v102, 2
    %v132 = vsel %vm129, %v130, %v131
    %v133 = vrot.slane %v103, 2
    %v134 = vsel %vm129, %v131, %v133
    %v135 = vrot.slane %v104, 2
    %v136 = vsel %vm129, %v133, %v135
    %137 = vrot.lane.b32.xlu0 %v132, 64
    %v138 = vpop.permute.xlu0 %137
    %139 = vrot.lane.b32.xlu0 %v134, 64
    %v140 = vpop.permute.xlu0 %139
    %141 = vrot.lane.b32.xlu0 %v136, 64
    %v142 = vpop.permute.xlu0 %141
    %143 = vrot.lane.b32.xlu0 %v135, 64
    %v144 = vpop.permute.xlu0 %143
    %vm149 = vcmask 1044480
    %v150 = vrot.slane %v101, 3
    %v151 = vrot.slane %v102, 3
    %v152 = vsel %vm149, %v150, %v151
    %v153 = vrot.slane %v103, 3
    %v154 = vsel %vm149, %v151, %v153
    %v155 = vrot.slane %v104, 3
    %v156 = vsel %vm149, %v153, %v155
    %157 = vrot.lane.b32.xlu0 %v152, 32
    %v158 = vpop.permute.xlu0 %157
    %159 = vrot.lane.b32.xlu0 %v154, 32
    %v160 = vpop.permute.xlu0 %159
    %161 = vrot.lane.b32.xlu0 %v156, 32
    %v162 = vpop.permute.xlu0 %161
    %163 = vrot.lane.b32.xlu0 %v155, 32
    %v164 = vpop.permute.xlu0 %163
    %vm169 = vcmask 1043456
    %v170 = vrot.slane %v101, 4
    %v171 = vrot.slane %v102, 4
    %v172 = vsel %vm169, %v170, %v171
    %v173 = vrot.slane %v103, 4
    %v174 = vsel %vm169, %v171, %v173
    %v175 = vrot.slane %v104, 4
    %v176 = vsel %vm169, %v173, %v175
    %vm181 = vcmask 785408
    %v182 = vsel %vm181, %v101, %v118
    %v183 = vsel %vm181, %v102, %v120
    %v184 = vsel %vm181, %v103, %v122
    %v185 = vsel %vm181, %v104, %v124
    %vm186 = vcmask 523264
    %v187 = vsel %vm186, %v118, %v138
    %v188 = vsel %vm186, %v120, %v140
    %v189 = vsel %vm186, %v122, %v142
    %v190 = vsel %vm186, %v124, %v144
    %vm191 = vcmask 261120
    %v192 = vsel %vm191, %v138, %v158
    %v193 = vsel %vm191, %v140, %v160
    %v194 = vsel %vm191, %v142, %v162
    %v195 = vsel %vm191, %v144, %v164
    %s196 = scalar_lea.vmem %s0, 32
    %v197 = vld [vmem:[%s196] sm:$0xff]
    %v198 = vld [vmem:[%s196 + $0x8] sm:$0xff]
    %v199 = vld [vmem:[%s196 + $0x10] sm:$0xff]
    %v200 = vld [vmem:[%s196 + $0x18] sm:$0xff]
    %v205 = vrot.slane %v197, 1
    %v206 = vrot.slane %v198, 1
    %v207 = vsel %vm109, %v205, %v206
    %v208 = vrot.slane %v199, 1
    %v209 = vsel %vm109, %v206, %v208
    %v210 = vrot.slane %v200, 1
    %v211 = vsel %vm109, %v208, %v210
    %212 = vrot.lane.b32.xlu0 %v207, 96
    %v213 = vpop.permute.xlu0 %212
    %214 = vrot.lane.b32.xlu0 %v209, 96
    %v215 = vpop.permute.xlu0 %214
    %216 = vrot.lane.b32.xlu0 %v211, 96
    %v217 = vpop.permute.xlu0 %216
    %218 = vrot.lane.b32.xlu0 %v210, 96
    %v219 = vpop.permute.xlu0 %218
    %v224 = vrot.slane %v197, 2
    %v225 = vrot.slane %v198, 2
    %v226 = vsel %vm129, %v224, %v225
    %v227 = vrot.slane %v199, 2
    %v228 = vsel %vm129, %v225, %v227
    %v229 = vrot.slane %v200, 2
    %v230 = vsel %vm129, %v227, %v229
    %231 = vrot.lane.b32.xlu0 %v226, 64
    %v232 = vpop.permute.xlu0 %231
    %233 = vrot.lane.b32.xlu0 %v228, 64
    %v234 = vpop.permute.xlu0 %233
    %235 = vrot.lane.b32.xlu0 %v230, 64
    %v236 = vpop.permute.xlu0 %235
    %237 = vrot.lane.b32.xlu0 %v229, 64
    %v238 = vpop.permute.xlu0 %237
    %v243 = vrot.slane %v197, 3
    %v244 = vrot.slane %v198, 3
    %v245 = vsel %vm149, %v243, %v244
    %v246 = vrot.slane %v199, 3
    %v247 = vsel %vm149, %v244, %v246
    %v248 = vrot.slane %v200, 3
    %v249 = vsel %vm149, %v246, %v248
    %250 = vrot.lane.b32.xlu0 %v245, 32
    %v251 = vpop.permute.xlu0 %250
    %252 = vrot.lane.b32.xlu0 %v247, 32
    %v253 = vpop.permute.xlu0 %252
    %254 = vrot.lane.b32.xlu0 %v249, 32
    %v255 = vpop.permute.xlu0 %254
    %256 = vrot.lane.b32.xlu0 %v248, 32
    %v257 = vpop.permute.xlu0 %256
    %v262 = vrot.slane %v197, 4
    %v263 = vrot.slane %v198, 4
    %v264 = vsel %vm169, %v262, %v263
    %v265 = vrot.slane %v199, 4
    %v266 = vsel %vm169, %v263, %v265
    %v267 = vrot.slane %v200, 4
    %v268 = vsel %vm169, %v265, %v267
    %v269 = vsel %vm181, %v197, %v213
    %v270 = vsel %vm181, %v198, %v215
    %v271 = vsel %vm181, %v199, %v217
    %v272 = vsel %vm181, %v200, %v219
    %v273 = vsel %vm186, %v213, %v232
    %v274 = vsel %vm186, %v215, %v234
    %v275 = vsel %vm186, %v217, %v236
    %v276 = vsel %vm186, %v219, %v238
    %v277 = vsel %vm191, %v232, %v251
    %v278 = vsel %vm191, %v234, %v253
    %v279 = vsel %vm191, %v236, %v255
    %v280 = vsel %vm191, %v238, %v257
    %v293 = vrot.slane %v269, 4
    %v294 = vrot.slane %v273, 4
    %v295 = vrot.slane %v277, 4
    %v296 = vrot.slane %v264, 4
    %v297 = vrot.slane %v270, 4
    %v298 = vsel %vm169, %v293, %v297
    %v299 = vrot.slane %v274, 4
    %v300 = vsel %vm169, %v294, %v299
    %v301 = vrot.slane %v278, 4
    %v302 = vsel %vm169, %v295, %v301
    %v303 = vrot.slane %v266, 4
    %v304 = vsel %vm169, %v296, %v303
    %v305 = vrot.slane %v271, 4
    %v306 = vsel %vm169, %v297, %v305
    %v307 = vrot.slane %v275, 4
    %v308 = vsel %vm169, %v299, %v307
    %v309 = vrot.slane %v279, 4
    %v310 = vsel %vm169, %v301, %v309
    %v311 = vrot.slane %v268, 4
    %v312 = vsel %vm169, %v303, %v311
    %v313 = vrot.slane %v272, 4
    %v314 = vsel %vm169, %v305, %v313
    %v315 = vrot.slane %v276, 4
    %v316 = vsel %vm169, %v307, %v315
    %v317 = vrot.slane %v280, 4
    %v318 = vsel %vm169, %v309, %v317
    %v319 = vrot.slane %v267, 4
    %v320 = vsel %vm169, %v311, %v319
    %v337 = vsel %vm169, %v185, %v293
    %v338 = vsel %vm169, %v190, %v294
    %v339 = vsel %vm169, %v195, %v295
    %v340 = vsel %vm169, %v175, %v296
    %v341 = vpack.c.bf16 %v183, %v182
    %v342 = vpack.c.bf16 %v188, %v187
    %v343 = vpack.c.bf16 %v193, %v192
    %v344 = vpack.c.bf16 %v174, %v172
    %v345 = vpack.c.bf16 %v337, %v184
    %v346 = vpack.c.bf16 %v338, %v189
    %v347 = vpack.c.bf16 %v339, %v194
    %v348 = vpack.c.bf16 %v340, %v176
    %v349 = vpack.c.bf16 %v306, %v298
    %v350 = vpack.c.bf16 %v308, %v300
    %v351 = vpack.c.bf16 %v310, %v302
    %v352 = vpack.c.bf16 %v312, %v304
    %v353 = vpack.c.bf16 %v314, %v314
    %v354 = vpack.c.bf16 %v316, %v316
    %v355 = vpack.c.bf16 %v318, %v318
    %v356 = vpack.c.bf16 %v320, %v320
    %v357 = vld [vmem:[%s1] sm:$0xff]
    %v358 = vld [vmem:[%s1 + $0x8] sm:$0xff]
    %v359 = vld [vmem:[%s1 + $0x10] sm:$0xff]
    %v360 = vld [vmem:[%s1 + $0x18] sm:$0xff]
    %v361 = vld [vmem:[%s1 + $0x20] sm:$0xff]
    %v362 = vld [vmem:[%s1 + $0x28] sm:$0xff]
    %v363 = vld [vmem:[%s1 + $0x30] sm:$0xff]
    %v364 = vld [vmem:[%s1 + $0x38] sm:$0xff]
    %v365 = vld [vmem:[%s1 + $0x40] sm:$0xff]
    %v366 = vld [vmem:[%s1 + $0x48] sm:$0xff]
    %v367 = vld [vmem:[%s1 + $0x50] sm:$0xff]
    %v368 = vld [vmem:[%s1 + $0x58] sm:$0xff]
    %v369 = vld [vmem:[%s1 + $0x60] sm:$0xff]
    %v370 = vld [vmem:[%s1 + $0x68] sm:$0xff]
    %v371 = vld [vmem:[%s1 + $0x70] sm:$0xff]
    %v372 = vld [vmem:[%s1 + $0x78] sm:$0xff]
    %v373 = vld [vmem:[%s1 + $0x80] sm:$0xff]
    %v374 = vld [vmem:[%s1 + $0x88] sm:$0xff]
    %v375 = vld [vmem:[%s1 + $0x90] sm:$0xff]
    %v376 = vld [vmem:[%s1 + $0x98] sm:$0xff]
    %v377 = vld [vmem:[%s1 + $0xa0] sm:$0xff]
    %v378 = vld [vmem:[%s1 + $0xa8] sm:$0xff]
    %v379 = vld [vmem:[%s1 + $0xb0] sm:$0xff]
    %v380 = vld [vmem:[%s1 + $0xb8] sm:$0xff]
    %v381 = vld [vmem:[%s1 + $0xc0] sm:$0xff]
    %v382 = vld [vmem:[%s1 + $0xc8] sm:$0xff]
    %v383 = vld [vmem:[%s1 + $0xd0] sm:$0xff]
    %v384 = vld [vmem:[%s1 + $0xd8] sm:$0xff]
    %v385 = vld [vmem:[%s1 + $0xe0] sm:$0xff]
    %v386 = vld [vmem:[%s1 + $0xe8] sm:$0xff]
    %v387 = vld [vmem:[%s1 + $0xf0] sm:$0xff]
    %v388 = vld [vmem:[%s1 + $0xf8] sm:$0xff]
    %v389 = vld [vmem:[%s1 + $0x100] sm:$0xff]
    %v390 = vld [vmem:[%s1 + $0x108] sm:$0xff]
    %v391 = vld [vmem:[%s1 + $0x110] sm:$0xff]
    %v392 = vld [vmem:[%s1 + $0x118] sm:$0xff]
    %v393 = vld [vmem:[%s1 + $0x120] sm:$0xff]
    %v394 = vld [vmem:[%s1 + $0x128] sm:$0xff]
    %v395 = vld [vmem:[%s1 + $0x130] sm:$0xff]
    %v396 = vld [vmem:[%s1 + $0x138] sm:$0xff]
    %v397 = vld [vmem:[%s1 + $0x140] sm:$0xff]
    %v398 = vld [vmem:[%s1 + $0x148] sm:$0xff]
    %v399 = vld [vmem:[%s1 + $0x150] sm:$0xff]
    %v400 = vld [vmem:[%s1 + $0x158] sm:$0xff]
    %v401 = vld [vmem:[%s1 + $0x160] sm:$0xff]
    %v402 = vld [vmem:[%s1 + $0x168] sm:$0xff]
    %v403 = vld [vmem:[%s1 + $0x170] sm:$0xff]
    %v404 = vld [vmem:[%s1 + $0x178] sm:$0xff]
    %v405 = vld [vmem:[%s1 + $0x180] sm:$0xff]
    %v406 = vld [vmem:[%s1 + $0x188] sm:$0xff]
    %v407 = vld [vmem:[%s1 + $0x190] sm:$0xff]
    %v408 = vld [vmem:[%s1 + $0x198] sm:$0xff]
    %v409 = vld [vmem:[%s1 + $0x1a0] sm:$0xff]
    %v410 = vld [vmem:[%s1 + $0x1a8] sm:$0xff]
    %v411 = vld [vmem:[%s1 + $0x1b0] sm:$0xff]
    %v412 = vld [vmem:[%s1 + $0x1b8] sm:$0xff]
    %v413 = vld [vmem:[%s1 + $0x1c0] sm:$0xff]
    %v414 = vld [vmem:[%s1 + $0x1c8] sm:$0xff]
    %v415 = vld [vmem:[%s1 + $0x1d0] sm:$0xff]
    %v416 = vld [vmem:[%s1 + $0x1d8] sm:$0xff]
    %v477 = vunpack.c.l.b16 %v357
    %v478 = vunpack.c.h.b16 %v357
    %v479 = vunpack.c.l.b16 %v358
    %v480 = vunpack.c.h.b16 %v358
    %v481 = vunpack.c.l.b16 %v359
    %v482 = vunpack.c.h.b16 %v359
    %v483 = vunpack.c.l.b16 %v360
    %v484 = vunpack.c.h.b16 %v360
    %v485 = vunpack.c.l.b16 %v361
    %v486 = vunpack.c.h.b16 %v361
    %v487 = vunpack.c.l.b16 %v362
    %v488 = vunpack.c.h.b16 %v362
    %v489 = vunpack.c.l.b16 %v363
    %v490 = vunpack.c.h.b16 %v363
    %v491 = vunpack.c.l.b16 %v364
    %v492 = vunpack.c.h.b16 %v364
    %v493 = vunpack.c.l.b16 %v365
    %v494 = vunpack.c.h.b16 %v365
    %v495 = vunpack.c.l.b16 %v366
    %v496 = vunpack.c.h.b16 %v366
    %v497 = vunpack.c.l.b16 %v367
    %v498 = vunpack.c.h.b16 %v367
    %v499 = vunpack.c.l.b16 %v368
    %v500 = vunpack.c.h.b16 %v368
    %v501 = vunpack.c.l.b16 %v369
    %v502 = vunpack.c.h.b16 %v369
    %v503 = vunpack.c.l.b16 %v370
    %v504 = vunpack.c.h.b16 %v370
    %v505 = vunpack.c.l.b16 %v371
    %v506 = vunpack.c.h.b16 %v371
    %v507 = vunpack.c.l.b16 %v372
    %v508 = vunpack.c.h.b16 %v372
    %v509 = vunpack.c.l.b16 %v373
    %v510 = vunpack.c.h.b16 %v373
    %v511 = vunpack.c.l.b16 %v374
    %v512 = vunpack.c.h.b16 %v374
    %v513 = vunpack.c.l.b16 %v375
    %v514 = vunpack.c.h.b16 %v375
    %v515 = vunpack.c.l.b16 %v376
    %v516 = vunpack.c.h.b16 %v376
    %v517 = vunpack.c.l.b16 %v377
    %v518 = vunpack.c.h.b16 %v377
    %v519 = vunpack.c.l.b16 %v378
    %v520 = vunpack.c.h.b16 %v378
    %v521 = vunpack.c.l.b16 %v379
    %v522 = vunpack.c.h.b16 %v379
    %v523 = vunpack.c.l.b16 %v380
    %v524 = vunpack.c.h.b16 %v380
    %v525 = vunpack.c.l.b16 %v381
    %v526 = vunpack.c.h.b16 %v381
    %v527 = vunpack.c.l.b16 %v382
    %v528 = vunpack.c.h.b16 %v382
    %v529 = vunpack.c.l.b16 %v383
    %v530 = vunpack.c.h.b16 %v383
    %v531 = vunpack.c.l.b16 %v384
    %v532 = vunpack.c.h.b16 %v384
    %v533 = vunpack.c.l.b16 %v385
    %v534 = vunpack.c.h.b16 %v385
    %v535 = vunpack.c.l.b16 %v386
    %v536 = vunpack.c.h.b16 %v386
    %v537 = vunpack.c.l.b16 %v387
    %v538 = vunpack.c.h.b16 %v387
    %v539 = vunpack.c.l.b16 %v388
    %v540 = vunpack.c.h.b16 %v388
    %v541 = vunpack.c.l.b16 %v389
    %v542 = vunpack.c.h.b16 %v389
    %v543 = vunpack.c.l.b16 %v390
    %v544 = vunpack.c.h.b16 %v390
    %v545 = vunpack.c.l.b16 %v391
    %v546 = vunpack.c.h.b16 %v391
    %v547 = vunpack.c.l.b16 %v392
    %v548 = vunpack.c.h.b16 %v392
    %v549 = vunpack.c.l.b16 %v393
    %v550 = vunpack.c.h.b16 %v393
    %v551 = vunpack.c.l.b16 %v394
    %v552 = vunpack.c.h.b16 %v394
    %v553 = vunpack.c.l.b16 %v395
    %v554 = vunpack.c.h.b16 %v395
    %v555 = vunpack.c.l.b16 %v396
    %v556 = vunpack.c.h.b16 %v396
    %v557 = vunpack.c.l.b16 %v397
    %v558 = vunpack.c.h.b16 %v397
    %v559 = vunpack.c.l.b16 %v398
    %v560 = vunpack.c.h.b16 %v398
    %v561 = vunpack.c.l.b16 %v399
    %v562 = vunpack.c.h.b16 %v399
    %v563 = vunpack.c.l.b16 %v400
    %v564 = vunpack.c.h.b16 %v400
    %v565 = vunpack.c.l.b16 %v401
    %v566 = vunpack.c.h.b16 %v401
    %v567 = vunpack.c.l.b16 %v402
    %v568 = vunpack.c.h.b16 %v402
    %v569 = vunpack.c.l.b16 %v403
    %v570 = vunpack.c.h.b16 %v403
    %v571 = vunpack.c.l.b16 %v404
    %v572 = vunpack.c.h.b16 %v404
    %v573 = vunpack.c.l.b16 %v405
    %v574 = vunpack.c.h.b16 %v405
    %v575 = vunpack.c.l.b16 %v406
    %v576 = vunpack.c.h.b16 %v406
    %v577 = vunpack.c.l.b16 %v407
    %v578 = vunpack.c.h.b16 %v407
    %v579 = vunpack.c.l.b16 %v408
    %v580 = vunpack.c.h.b16 %v408
    %v581 = vunpack.c.l.b16 %v409
    %v582 = vunpack.c.h.b16 %v409
    %v583 = vunpack.c.l.b16 %v410
    %v584 = vunpack.c.h.b16 %v410
    %v585 = vunpack.c.l.b16 %v411
    %v586 = vunpack.c.h.b16 %v411
    %v587 = vunpack.c.l.b16 %v412
    %v588 = vunpack.c.h.b16 %v412
    %v589 = vunpack.c.l.b16 %v413
    %v590 = vunpack.c.h.b16 %v413
    %v591 = vunpack.c.l.b16 %v414
    %v592 = vunpack.c.h.b16 %v414
    %v593 = vunpack.c.l.b16 %v415
    %v594 = vunpack.c.h.b16 %v415
    %v595 = vunpack.c.l.b16 %v416
    %v596 = vunpack.c.h.b16 %v416
    %v597 = vpack.c.b16 %v479, %v477
    %v598 = vpack.c.b16 %v480, %v478
    %v599 = vpack.c.b16 %v483, %v481
    %v600 = vpack.c.b16 %v484, %v482
    %v601 = vpack.c.b16 %v487, %v485
    %v602 = vpack.c.b16 %v488, %v486
    %v603 = vpack.c.b16 %v491, %v489
    %v604 = vpack.c.b16 %v492, %v490
    %v605 = vpack.c.b16 %v495, %v493
    %v606 = vpack.c.b16 %v496, %v494
    %v607 = vpack.c.b16 %v499, %v497
    %v608 = vpack.c.b16 %v500, %v498
    %v609 = vpack.c.b16 %v503, %v501
    %v610 = vpack.c.b16 %v504, %v502
    %v611 = vpack.c.b16 %v507, %v505
    %v612 = vpack.c.b16 %v508, %v506
    %v613 = vpack.c.b16 %v511, %v509
    %v614 = vpack.c.b16 %v512, %v510
    %v615 = vpack.c.b16 %v515, %v513
    %v616 = vpack.c.b16 %v516, %v514
    %v617 = vpack.c.b16 %v519, %v517
    %v618 = vpack.c.b16 %v520, %v518
    %v619 = vpack.c.b16 %v523, %v521
    %v620 = vpack.c.b16 %v524, %v522
    %v621 = vpack.c.b16 %v527, %v525
    %v622 = vpack.c.b16 %v528, %v526
    %v623 = vpack.c.b16 %v531, %v529
    %v624 = vpack.c.b16 %v532, %v530
    %v625 = vpack.c.b16 %v535, %v533
    %v626 = vpack.c.b16 %v536, %v534
    %v627 = vpack.c.b16 %v539, %v537
    %v628 = vpack.c.b16 %v540, %v538
    %v629 = vpack.c.b16 %v543, %v541
    %v630 = vpack.c.b16 %v544, %v542
    %v631 = vpack.c.b16 %v547, %v545
    %v632 = vpack.c.b16 %v548, %v546
    %v633 = vpack.c.b16 %v551, %v549
    %v634 = vpack.c.b16 %v552, %v550
    %v635 = vpack.c.b16 %v555, %v553
    %v636 = vpack.c.b16 %v556, %v554
    %v637 = vpack.c.b16 %v559, %v557
    %v638 = vpack.c.b16 %v560, %v558
    %v639 = vpack.c.b16 %v563, %v561
    %v640 = vpack.c.b16 %v564, %v562
    %v641 = vpack.c.b16 %v567, %v565
    %v642 = vpack.c.b16 %v568, %v566
    %v643 = vpack.c.b16 %v571, %v569
    %v644 = vpack.c.b16 %v572, %v570
    %v645 = vpack.c.b16 %v575, %v573
    %v646 = vpack.c.b16 %v576, %v574
    %v647 = vpack.c.b16 %v579, %v577
    %v648 = vpack.c.b16 %v580, %v578
    %v649 = vpack.c.b16 %v583, %v581
    %v650 = vpack.c.b16 %v584, %v582
    %v651 = vpack.c.b16 %v587, %v585
    %v652 = vpack.c.b16 %v588, %v586
    %v653 = vpack.c.b16 %v591, %v589
    %v654 = vpack.c.b16 %v592, %v590
    %v655 = vpack.c.b16 %v595, %v593
    %v656 = vpack.c.b16 %v596, %v594
    %v718 = vsel %vm181, %v344, 0
    %v721 = vsel %vm181, %v348, 0
    %v724 = vsel %vm181, %v352, 0
    %v727 = vsel %vm181, %v356, 0
    %729 = vmatprep.subr.bf16.mxu0 %v612
    %730 = vmatpush1.bf16.msra.mxu0 %v611
    %731 = vmatprep.subr.bf16.mxu0 %v610
    %732 = vmatpush1.bf16.msra.mxu0 %v609
    %733 = vmatprep.subr.bf16.mxu0 %v608
    %734 = vmatpush1.bf16.msra.mxu0 %v607
    %735 = vmatprep.subr.bf16.mxu0 %v606
    %736 = vmatpush1.bf16.msra.mxu0 %v605
    %737 = vmatprep.subr.bf16.mxu0 %v604
    %738 = vmatpush1.bf16.msra.mxu0 %v603
    %739 = vmatprep.subr.bf16.mxu0 %v602
    %740 = vmatpush1.bf16.msra.mxu0 %v601
    %741 = vmatprep.subr.bf16.mxu0 %v600
    %742 = vmatpush1.bf16.msra.mxu0 %v599
    %743 = vmatprep.subr.bf16.mxu0 %v598
    %744 = vmatpush1.bf16.msra.mxu0 %v597
    %745 = vmatprep.subr.bf16.mxu0 %v628
    %746 = vmatpush2.bf16.msra.mxu0 %v627
    %747 = vmatprep.subr.bf16.mxu0 %v626
    %748 = vmatpush2.bf16.msra.mxu0 %v625
    %749 = vmatprep.subr.bf16.mxu0 %v624
    %750 = vmatpush2.bf16.msra.mxu0 %v623
    %751 = vmatprep.subr.bf16.mxu0 %v622
    %752 = vmatpush2.bf16.msra.mxu0 %v621
    %753 = vmatprep.subr.bf16.mxu0 %v620
    %754 = vmatpush2.bf16.msra.mxu0 %v619
    %755 = vmatprep.subr.bf16.mxu0 %v618
    %756 = vmatpush2.bf16.msra.mxu0 %v617
    %757 = vmatprep.subr.bf16.mxu0 %v616
    %758 = vmatpush2.bf16.msra.mxu0 %v615
    %759 = vmatprep.subr.bf16.mxu0 %v614
    %760 = vmatpush2.bf16.msra.mxu0 %v613
    %761 = vmatprep.mubr.bf16.mxu0 %v342
    %762 = vmatmul.mubr.bf16.gmra.mxu0 %v341
    %v763 = vpop.f32.mrf.mxu0
    %v764 = vadd.f32 0.0, %v763
    %v765 = vpop.f32.mrf.mxu0
    %v766 = vadd.f32 0.0, %v765
    %v767 = vpop.f32.mrf.mxu0
    %v768 = vadd.f32 0.0, %v767
    %v769 = vpop.f32.mrf.mxu0
    %v770 = vadd.f32 0.0, %v769
    %771 = vmatprep.mubr.bf16.mxu0 %v346
    %772 = vmatmul.mubr.bf16.gmra.mxu0 %v345
    %v773 = vpop.f32.mrf.mxu0
    %v774 = vadd.f32 0.0, %v773
    %v775 = vpop.f32.mrf.mxu0
    %v776 = vadd.f32 0.0, %v775
    %v777 = vpop.f32.mrf.mxu0
    %v778 = vadd.f32 0.0, %v777
    %v779 = vpop.f32.mrf.mxu0
    %v780 = vadd.f32 0.0, %v779
    %781 = vmatprep.mubr.bf16.mxu0 %v350
    %782 = vmatmul.mubr.bf16.gmra.mxu0 %v349
    %v783 = vpop.f32.mrf.mxu0
    %v784 = vadd.f32 0.0, %v783
    %v785 = vpop.f32.mrf.mxu0
    %v786 = vadd.f32 0.0, %v785
    %v787 = vpop.f32.mrf.mxu0
    %v788 = vadd.f32 0.0, %v787
    %v789 = vpop.f32.mrf.mxu0
    %v790 = vadd.f32 0.0, %v789
    %791 = vmatprep.mubr.bf16.mxu0 %v354
    %792 = vmatmul.mubr.bf16.gmra.mxu0 %v353
    %v793 = vpop.f32.mrf.mxu0
    %v794 = vadd.f32 0.0, %v793
    %v795 = vpop.f32.mrf.mxu0
    %v796 = vadd.f32 0.0, %v795
    %v797 = vpop.f32.mrf.mxu0
    %v798 = vpop.f32.mrf.mxu0
    %799 = vdwg.mxu0
    %800 = vmatprep.subr.bf16.mxu0 %v644
    %801 = vmatpush1.bf16.msra.mxu0 %v643
    %802 = vmatprep.subr.bf16.mxu0 %v642
    %803 = vmatpush1.bf16.msra.mxu0 %v641
    %804 = vmatprep.subr.bf16.mxu0 %v640
    %805 = vmatpush1.bf16.msra.mxu0 %v639
    %806 = vmatprep.subr.bf16.mxu0 %v638
    %807 = vmatpush1.bf16.msra.mxu0 %v637
    %808 = vmatprep.subr.bf16.mxu0 %v636
    %809 = vmatpush1.bf16.msra.mxu0 %v635
    %810 = vmatprep.subr.bf16.mxu0 %v634
    %811 = vmatpush1.bf16.msra.mxu0 %v633
    %812 = vmatprep.subr.bf16.mxu0 %v632
    %813 = vmatpush1.bf16.msra.mxu0 %v631
    %814 = vmatprep.subr.bf16.mxu0 %v630
    %815 = vmatpush1.bf16.msra.mxu0 %v629
    %816 = vmatprep.subr.bf16.mxu0 0
    %817 = vmatpush2.bf16.msra.mxu0 0
    %818 = vmatprep.subr.bf16.mxu0 0
    %819 = vmatpush2.bf16.msra.mxu0 0
    %820 = vmatprep.subr.bf16.mxu0 %v656
    %821 = vmatpush2.bf16.msra.mxu0 %v655
    %822 = vmatprep.subr.bf16.mxu0 %v654
    %823 = vmatpush2.bf16.msra.mxu0 %v653
    %824 = vmatprep.subr.bf16.mxu0 %v652
    %825 = vmatpush2.bf16.msra.mxu0 %v651
    %826 = vmatprep.subr.bf16.mxu0 %v650
    %827 = vmatpush2.bf16.msra.mxu0 %v649
    %828 = vmatprep.subr.bf16.mxu0 %v648
    %829 = vmatpush2.bf16.msra.mxu0 %v647
    %830 = vmatprep.subr.bf16.mxu0 %v646
    %831 = vmatpush2.bf16.msra.mxu0 %v645
    %832 = vmatprep.mubr.bf16.mxu0 %v718
    %833 = vmatmul.mubr.bf16.gmra.mxu0 %v343
    %v834 = vpop.f32.mrf.mxu0
    %v835 = vadd.f32 %v764, %v834
    %v836 = vpop.f32.mrf.mxu0
    %v837 = vadd.f32 %v766, %v836
    %v838 = vpop.f32.mrf.mxu0
    %v839 = vadd.f32 %v768, %v838
    %v840 = vpop.f32.mrf.mxu0
    %v841 = vadd.f32 %v770, %v840
    %842 = vmatprep.mubr.bf16.mxu0 %v721
    %843 = vmatmul.mubr.bf16.gmra.mxu0 %v347
    %v844 = vpop.f32.mrf.mxu0
    %v845 = vadd.f32 %v774, %v844
    %v846 = vpop.f32.mrf.mxu0
    %v847 = vadd.f32 %v776, %v846
    %v848 = vpop.f32.mrf.mxu0
    %v849 = vadd.f32 %v778, %v848
    %v850 = vpop.f32.mrf.mxu0
    %v851 = vadd.f32 %v780, %v850
    %852 = vmatprep.mubr.bf16.mxu0 %v724
    %853 = vmatmul.mubr.bf16.gmra.mxu0 %v351
    %v854 = vpop.f32.mrf.mxu0
    %v855 = vadd.f32 %v784, %v854
    %v856 = vpop.f32.mrf.mxu0
    %v857 = vadd.f32 %v786, %v856
    %v858 = vpop.f32.mrf.mxu0
    %v859 = vadd.f32 %v788, %v858
    %v860 = vpop.f32.mrf.mxu0
    %v861 = vadd.f32 %v790, %v860
    %862 = vmatprep.mubr.bf16.mxu0 %v727
    %863 = vmatmul.mubr.bf16.gmra.mxu0 %v355
    %v864 = vpop.f32.mrf.mxu0
    %v865 = vadd.f32 %v794, %v864
    %v866 = vpop.f32.mrf.mxu0
    %v867 = vadd.f32 %v796, %v866
    %v868 = vpop.f32.mrf.mxu0
    %v869 = vpop.f32.mrf.mxu0
    %870 = vdwg.mxu0
    %v871 = vadd.f32 %v835, %v839
    %v872 = vadd.f32 %v871, %v845
    %v873 = vadd.f32 %v872, %v849
    %v874 = vadd.f32 %v873, %v855
    %v875 = vadd.f32 %v874, %v859
    %v876 = vadd.f32 %v875, %v865
    %v877 = vrot.slane %v876, 4
    %v878 = vadd.f32 %v876, %v877
    %v879 = vrot.slane %v878, 2
    %v880 = vadd.f32 %v878, %v879
    %v881 = vrot.slane %v880, 1
    %v882 = vadd.f32 %v880, %v881
    %vm883 = vcmask 326656
    %v884 = vsel %vm883, %v837, 0.0
    %v885 = vsel %vm883, %v841, 0.0
    %v886 = vadd.f32 %v884, %v885
    %v887 = vsel %vm883, %v847, 0.0
    %v888 = vadd.f32 %v886, %v887
    %v889 = vsel %vm883, %v851, 0.0
    %v890 = vadd.f32 %v888, %v889
    %v891 = vsel %vm883, %v857, 0.0
    %v892 = vadd.f32 %v890, %v891
    %v893 = vsel %vm883, %v861, 0.0
    %v894 = vadd.f32 %v892, %v893
    %v895 = vsel %vm883, %v867, 0.0
    %v896 = vadd.f32 %v894, %v895
    %v897 = vrot.slane %v896, 4
    %v898 = vadd.f32 %v896, %v897
    %v899 = vrot.slane %v898, 2
    %v900 = vadd.f32 %v898, %v899
    %v901 = vrot.slane %v900, 1
    %v902 = vadd.f32 %v900, %v901
    %v903 = vmul.f32 %v835, %v835
    %v904 = vmul.f32 %v837, %v837
    %v905 = vmul.f32 %v839, %v839
    %v906 = vmul.f32 %v841, %v841
    %v907 = vmul.f32 %v845, %v845
    %v908 = vmul.f32 %v847, %v847
    %v909 = vmul.f32 %v849, %v849
    %v910 = vmul.f32 %v851, %v851
    %v911 = vmul.f32 %v855, %v855
    %v912 = vmul.f32 %v857, %v857
    %v913 = vmul.f32 %v859, %v859
    %v914 = vmul.f32 %v861, %v861
    %v915 = vmul.f32 %v865, %v865
    %v916 = vmul.f32 %v867, %v867
    %v917 = vadd.f32 %v903, %v905
    %v918 = vadd.f32 %v917, %v907
    %v919 = vadd.f32 %v918, %v909
    %v920 = vadd.f32 %v919, %v911
    %v921 = vadd.f32 %v920, %v913
    %v922 = vadd.f32 %v921, %v915
    %v923 = vrot.slane %v922, 4
    %v924 = vadd.f32 %v922, %v923
    %v925 = vrot.slane %v924, 2
    %v926 = vadd.f32 %v924, %v925
    %v927 = vrot.slane %v926, 1
    %v928 = vadd.f32 %v926, %v927
    %v929 = vsel %vm883, %v904, 0.0
    %v930 = vsel %vm883, %v906, 0.0
    %v931 = vadd.f32 %v929, %v930
    %v932 = vsel %vm883, %v908, 0.0
    %v933 = vadd.f32 %v931, %v932
    %v934 = vsel %vm883, %v910, 0.0
    %v935 = vadd.f32 %v933, %v934
    %v936 = vsel %vm883, %v912, 0.0
    %v937 = vadd.f32 %v935, %v936
    %v938 = vsel %vm883, %v914, 0.0
    %v939 = vadd.f32 %v937, %v938
    %v940 = vsel %vm883, %v916, 0.0
    %v941 = vadd.f32 %v939, %v940
    %v942 = vrot.slane %v941, 4
    %v943 = vadd.f32 %v941, %v942
    %v944 = vrot.slane %v943, 2
    %v945 = vadd.f32 %v943, %v944
    %v946 = vrot.slane %v945, 1
    %v947 = vadd.f32 %v945, %v946
    %vm948 = vcmask 1040384
    %v949 = vsel %vm948, %v882, %v928
    %v950 = vsel %vm948, %v902, %v947
    %v951 = vld [vmem:[%s2] sm:$0xff]
    %v952 = vld [vmem:[%s2 + $0x8] sm:$0xff]
    %v953 = vld [vmem:[%s2 + $0x10] sm:$0xff]
    %v954 = vld [vmem:[%s2 + $0x18] sm:$0xff]
    %v955 = vld [vmem:[%s2 + $0x20] sm:$0xff]
    %v956 = vld [vmem:[%s2 + $0x28] sm:$0xff]
    %v957 = vld [vmem:[%s2 + $0x30] sm:$0xff]
    %v958 = vld [vmem:[%s2 + $0x38] sm:$0xff]
    %v959 = vld [vmem:[%s2 + $0x40] sm:$0xff]
    %v960 = vld [vmem:[%s2 + $0x48] sm:$0xff]
    %v961 = vld [vmem:[%s2 + $0x50] sm:$0xff]
    %v962 = vld [vmem:[%s2 + $0x58] sm:$0xff]
    %v963 = vld [vmem:[%s2 + $0x60] sm:$0xff]
    %v964 = vld [vmem:[%s2 + $0x68] sm:$0xff]
    %v965 = vld [vmem:[%s2 + $0x70] sm:$0xff]
    %v966 = vld [vmem:[%s2 + $0x78] sm:$0xff]
    %v967 = vld [vmem:[%s2 + $0x80] sm:$0xff]
    %v968 = vld [vmem:[%s2 + $0x88] sm:$0xff]
    %v969 = vld [vmem:[%s2 + $0x90] sm:$0xff]
    %v970 = vld [vmem:[%s2 + $0x98] sm:$0xff]
    %v971 = vld [vmem:[%s2 + $0xa0] sm:$0xff]
    %v973 = vsel %vm883, %v950, 0
    %975 = vmatprep.subr.mxu0 0.0
    %976 = vmatpush1.msra.mxu0 %v966
    %977 = vmatprep.subr.mxu0 0.0
    %978 = vmatpush1.msra.mxu0 %v965
    %979 = vmatprep.subr.mxu0 0.0
    %980 = vmatpush1.msra.mxu0 %v964
    %981 = vmatprep.subr.mxu0 0.0
    %982 = vmatpush1.msra.mxu0 %v963
    %983 = vmatprep.subr.mxu0 0.0
    %984 = vmatpush1.msra.mxu0 %v962
    %985 = vmatprep.subr.mxu0 0.0
    %986 = vmatpush1.msra.mxu0 %v961
    %987 = vmatprep.subr.mxu0 0.0
    %988 = vmatpush1.msra.mxu0 %v960
    %989 = vmatprep.subr.mxu0 0.0
    %990 = vmatpush1.msra.mxu0 %v959
    %991 = vmatprep.subr.mxu0 0.0
    %992 = vmatpush1.msra.mxu0 %v958
    %993 = vmatprep.subr.mxu0 0.0
    %994 = vmatpush1.msra.mxu0 %v957
    %995 = vmatprep.subr.mxu0 0.0
    %996 = vmatpush1.msra.mxu0 %v956
    %997 = vmatprep.subr.mxu0 0.0
    %998 = vmatpush1.msra.mxu0 %v955
    %999 = vmatprep.subr.mxu0 0.0
    %1000 = vmatpush1.msra.mxu0 %v954
    %1001 = vmatprep.subr.mxu0 0.0
    %1002 = vmatpush1.msra.mxu0 %v953
    %1003 = vmatprep.subr.mxu0 0.0
    %1004 = vmatpush1.msra.mxu0 %v952
    %1005 = vmatprep.subr.mxu0 0.0
    %1006 = vmatpush1.msra.mxu0 %v951
    %1007 = vmatprep.subr.mxu0 0.0
    %1008 = vmatpush2.msra.mxu0 0.0
    %1009 = vmatprep.subr.mxu0 0.0
    %1010 = vmatpush2.msra.mxu0 0.0
    %1011 = vmatprep.subr.mxu0 0.0
    %1012 = vmatpush2.msra.mxu0 0.0
    %1013 = vmatprep.subr.mxu0 0.0
    %1014 = vmatpush2.msra.mxu0 0.0
    %1015 = vmatprep.subr.mxu0 0.0
    %1016 = vmatpush2.msra.mxu0 0.0
    %1017 = vmatprep.subr.mxu0 0.0
    %1018 = vmatpush2.msra.mxu0 0.0
    %1019 = vmatprep.subr.mxu0 0.0
    %1020 = vmatpush2.msra.mxu0 0.0
    %1021 = vmatprep.subr.mxu0 0.0
    %1022 = vmatpush2.msra.mxu0 0.0
    %1023 = vmatprep.subr.mxu0 0.0
    %1024 = vmatpush2.msra.mxu0 0.0
    %1025 = vmatprep.subr.mxu0 0.0
    %1026 = vmatpush2.msra.mxu0 0.0
    %1027 = vmatprep.subr.mxu0 0.0
    %1028 = vmatpush2.msra.mxu0 0.0
    %1029 = vmatprep.subr.mxu0 0.0
    %1030 = vmatpush2.msra.mxu0 %v971
    %1031 = vmatprep.subr.mxu0 0.0
    %1032 = vmatpush2.msra.mxu0 %v970
    %1033 = vmatprep.subr.mxu0 0.0
    %1034 = vmatpush2.msra.mxu0 %v969
    %1035 = vmatprep.subr.mxu0 0.0
    %1036 = vmatpush2.msra.mxu0 %v968
    %1037 = vmatprep.subr.mxu0 0.0
    %1038 = vmatpush2.msra.mxu0 %v967
    %1039 = vmatprep.mubr.f32.mxu0 %v973
    %1040 = vmatmul.mubr.f32.gmra.mxu0 %v949
    %v1041 = vpop.f32.mrf.mxu0
    %v1042 = vadd.f32 0.0, %v1041
    %v1043 = vpop.f32.mrf.mxu0
    %1044 = vdwg.mxu0
    %v1045 = vmul.f32 %v1042, 0.0006377551
    %v1046 = vmul.f32 %v1045, %v1045
    %v1048 = vrot.slane %v1046, 7
    %v1050 = vsub.f32 %v1045, %v1048
    %v1051 = vmax.f32 %v1050, 0.0
    %v1052 = vadd.f32 %v1051, 1e-05
    %v1053 = vrsqrt.pop %v1052
    %v1054 = vld [vmem:[%s4] sm:$0x1]
    %v1057 = vunpack.c.l.s4 1966171168
    %v1058 = vunpack.c.0.s8 %v1057
    %v1059 = vlaneseq
    %v1060 = vshrl.u32 %v1059, 7
    %v1061 = vsub.s32 %v1058, %v1060
    %v1062 = vrot.slane %v1053, %v1061
    %v1063 = vcombine.high %v1062, %v1062
    %v1065 = vunpack.c.l.s4 1966171168
    %v1066 = vunpack.c.0.s8 %v1065
    %v1067 = vlaneseq
    %v1068 = vshrl.u32 %v1067, 7
    %v1069 = vsub.s32 %v1066, %v1068
    %v1070 = vrot.slane %v1063, %v1069
    %v1072 = vmul.f32 %v1054, %v1070
    %v1073 = vld [vmem:[%s5] sm:$0x1]
    %v1074 = vmul.f32 %v1072, %v1045
    %v1075 = vsub.f32 %v1073, %v1074
    %v1077 = vlaneseq
    %v1078 = vshrl.u32 %v1077, 7
    %v1079 = vsub.s32 0, %v1078
    %v1080 = vrot.slane %v1075, %v1079
    %v1082 = vsel %vm948, %v1072, %v1080
    %v1083 = vld [vmem:[%s3] sm:$0x3f]
    %v1084 = vld [vmem:[%s3 + $0x8] sm:$0x3f]
    %vm1085 = vcmask 48128
    %v1087 = vsel %vm1085, %v1082, 0
    %v1090 = vsel %vm129, %v1083, 0
    %v1093 = vsel %vm129, %v1084, 0
    %1095 = vmatprep.subr.mxu0 0.0
    %1096 = vmatpush1.msra.mxu0 0.0
    %1097 = vmatprep.subr.mxu0 0.0
    %1098 = vmatpush1.msra.mxu0 0.0
    %1099 = vmatprep.subr.mxu0 0.0
    %1100 = vmatpush1.msra.mxu0 0.0
    %1101 = vmatprep.subr.mxu0 0.0
    %1102 = vmatpush1.msra.mxu0 0.0
    %1103 = vmatprep.subr.mxu0 0.0
    %1104 = vmatpush1.msra.mxu0 0.0
    %1105 = vmatprep.subr.mxu0 0.0
    %1106 = vmatpush1.msra.mxu0 0.0
    %1107 = vmatprep.subr.mxu0 0.0
    %1108 = vmatpush1.msra.mxu0 0.0
    %1109 = vmatprep.subr.mxu0 0.0
    %1110 = vmatpush1.msra.mxu0 0.0
    %1111 = vmatprep.subr.mxu0 0.0
    %1112 = vmatpush1.msra.mxu0 0.0
    %1113 = vmatprep.subr.mxu0 0.0
    %1114 = vmatpush1.msra.mxu0 0.0
    %1115 = vmatprep.subr.mxu0 0.0
    %1116 = vmatpush1.msra.mxu0 0.0
    %1117 = vmatprep.subr.mxu0 0.0
    %1118 = vmatpush1.msra.mxu0 0.0
    %1119 = vmatprep.subr.mxu0 0.0
    %1120 = vmatpush1.msra.mxu0 0.0
    %1121 = vmatprep.subr.mxu0 0.0
    %1122 = vmatpush1.msra.mxu0 0.0
    %1123 = vmatprep.subr.mxu0 0.0
    %1124 = vmatpush1.msra.mxu0 0.0
    %1125 = vmatprep.subr.mxu0 %v1093
    %1126 = vmatpush1.msra.mxu0 %v1090
    %1127 = vmatprep.subr.mxu0 0.0
    %1128 = vmatpush2.msra.mxu0 0.0
    %1129 = vmatprep.subr.mxu0 0.0
    %1130 = vmatpush2.msra.mxu0 0.0
    %1131 = vmatprep.subr.mxu0 0.0
    %1132 = vmatpush2.msra.mxu0 0.0
    %1133 = vmatprep.subr.mxu0 0.0
    %1134 = vmatpush2.msra.mxu0 0.0
    %1135 = vmatprep.subr.mxu0 0.0
    %1136 = vmatpush2.msra.mxu0 0.0
    %1137 = vmatprep.subr.mxu0 0.0
    %1138 = vmatpush2.msra.mxu0 0.0
    %1139 = vmatprep.subr.mxu0 0.0
    %1140 = vmatpush2.msra.mxu0 0.0
    %1141 = vmatprep.subr.mxu0 0.0
    %1142 = vmatpush2.msra.mxu0 0.0
    %1143 = vmatprep.subr.mxu0 0.0
    %1144 = vmatpush2.msra.mxu0 0.0
    %1145 = vmatprep.subr.mxu0 0.0
    %1146 = vmatpush2.msra.mxu0 0.0
    %1147 = vmatprep.subr.mxu0 0.0
    %1148 = vmatpush2.msra.mxu0 0.0
    %1149 = vmatprep.subr.mxu0 0.0
    %1150 = vmatpush2.msra.mxu0 0.0
    %1151 = vmatprep.subr.mxu0 0.0
    %1152 = vmatpush2.msra.mxu0 0.0
    %1153 = vmatprep.subr.mxu0 0.0
    %1154 = vmatpush2.msra.mxu0 0.0
    %1155 = vmatprep.subr.mxu0 0.0
    %1156 = vmatpush2.msra.mxu0 0.0
    %1157 = vmatprep.subr.mxu0 0.0
    %1158 = vmatpush2.msra.mxu0 0.0
    %1159 = vmatprep.mubr.f32.mxu0 0.0
    %1160 = vmatmul.mubr.f32.gmra.mxu0 %v1087
    %v1161 = vpop.f32.mrf.mxu0
    %v1162 = vadd.f32 0.0, %v1161
    %v1163 = vpop.f32.mrf.mxu0
    %v1164 = vadd.f32 0.0, %v1163
    %1165 = vdwg.mxu0
    %v1166 = vlaneseq
    %v1167 = vshrl.u32 %v1166, 7
    %v1168 = vsub.s32 0, %v1167
    %v1169 = vrot.slane %v1162, %v1168
    %v1170 = vlaneseq
    %v1171 = vshrl.u32 %v1170, 7
    %v1172 = vsub.s32 0, %v1171
    %v1173 = vrot.slane %v1164, %v1172
    %v1174 = vmul.f32 %v835, %v1169
    %v1175 = vmul.f32 %v837, %v1173
    %v1176 = vmul.f32 %v839, %v1169
    %v1177 = vmul.f32 %v841, %v1173
    %v1178 = vmul.f32 %v845, %v1169
    %v1179 = vmul.f32 %v847, %v1173
    %v1180 = vmul.f32 %v849, %v1169
    %v1181 = vmul.f32 %v851, %v1173
    %v1182 = vmul.f32 %v855, %v1169
    %v1183 = vmul.f32 %v857, %v1173
    %v1184 = vmul.f32 %v859, %v1169
    %v1185 = vmul.f32 %v861, %v1173
    %v1186 = vmul.f32 %v865, %v1169
    %v1187 = vmul.f32 %v867, %v1173
    %v1188 = vlaneseq
    %v1189 = vshrl.u32 %v1188, 7
    %v1190 = vsub.s32 1, %v1189
    %v1191 = vrot.slane %v1162, %v1190
    %v1192 = vlaneseq
    %v1193 = vshrl.u32 %v1192, 7
    %v1194 = vsub.s32 1, %v1193
    %v1195 = vrot.slane %v1164, %v1194
    %v1196 = vadd.f32 %v1174, %v1191
    %v1197 = vadd.f32 %v1175, %v1195
    %v1198 = vadd.f32 %v1176, %v1191
    %v1199 = vadd.f32 %v1177, %v1195
    %v1200 = vadd.f32 %v1178, %v1191
    %v1201 = vadd.f32 %v1179, %v1195
    %v1202 = vadd.f32 %v1180, %v1191
    %v1203 = vadd.f32 %v1181, %v1195
    %v1204 = vadd.f32 %v1182, %v1191
    %v1205 = vadd.f32 %v1183, %v1195
    %v1206 = vadd.f32 %v1184, %v1191
    %v1207 = vadd.f32 %v1185, %v1195
    %v1208 = vadd.f32 %v1186, %v1191
    %v1209 = vadd.f32 %v1187, %v1195
    %v1210 = vmax.f32 %v1196, 0.0
    %v1211 = vmax.f32 %v1197, 0.0
    %v1212 = vmax.f32 %v1198, 0.0
    %v1213 = vmax.f32 %v1199, 0.0
    %v1214 = vmax.f32 %v1200, 0.0
    %v1215 = vmax.f32 %v1201, 0.0
    %v1216 = vmax.f32 %v1202, 0.0
    %v1217 = vmax.f32 %v1203, 0.0
    %v1218 = vmax.f32 %v1204, 0.0
    %v1219 = vmax.f32 %v1205, 0.0
    %v1220 = vmax.f32 %v1206, 0.0
    %v1221 = vmax.f32 %v1207, 0.0
    %v1222 = vmax.f32 %v1208, 0.0
    %v1223 = vmax.f32 %v1209, 0.0
    %v1224 = vld [vmem:[#allocation2] sm:$0xff]
    %v1225 = vld [vmem:[#allocation2 + $0x8] sm:$0xff]
    %v1226 = vld [vmem:[#allocation2 + $0x10] sm:$0xff]
    %v1227 = vld [vmem:[#allocation2 + $0x18] sm:$0xff]
    %v1228 = vld [vmem:[#allocation2 + $0x20] sm:$0xff]
    %v1229 = vld [vmem:[#allocation2 + $0x28] sm:$0xff]
    %v1230 = vld [vmem:[#allocation2 + $0x30] sm:$0xff]
    %v1231 = vld [vmem:[#allocation2 + $0x38] sm:$0xff]
    %v1232 = vld [vmem:[#allocation2 + $0x40] sm:$0xff]
    %v1233 = vld [vmem:[#allocation2 + $0x48] sm:$0xff]
    %v1234 = vld [vmem:[#allocation2 + $0x50] sm:$0xff]
    %v1235 = vld [vmem:[#allocation2 + $0x58] sm:$0xff]
    %v1236 = vld [vmem:[#allocation2 + $0x60] sm:$0xff]
    %v1237 = vld [vmem:[#allocation2 + $0x68] sm:$0xff]
    %v1238 = vld [vmem:[#allocation2 + $0x70] sm:$0xff]
    %v1239 = vld [vmem:[#allocation2 + $0x78] sm:$0xff]
    %v1240 = vld [vmem:[#allocation2 + $0x80] sm:$0xff]
    %v1241 = vld [vmem:[#allocation2 + $0x88] sm:$0xff]
    %v1242 = vld [vmem:[#allocation2 + $0x90] sm:$0xff]
    %v1243 = vld [vmem:[#allocation2 + $0x98] sm:$0xff]
    %v1244 = vld [vmem:[#allocation2 + $0xa0] sm:$0xff]
    %v1246 = vsel %vm883, %v1211, 0
    %v1249 = vsel %vm883, %v1213, 0
    %v1252 = vsel %vm883, %v1215, 0
    %v1255 = vsel %vm883, %v1217, 0
    %v1258 = vsel %vm883, %v1219, 0
    %v1261 = vsel %vm883, %v1221, 0
    %v1264 = vsel %vm883, %v1223, 0
    %1266 = vmatprep.subr.mxu0 0.0
    %1267 = vmatpush1.msra.mxu0 %v1239
    %1268 = vmatprep.subr.mxu0 0.0
    %1269 = vmatpush1.msra.mxu0 %v1238
    %1270 = vmatprep.subr.mxu0 0.0
    %1271 = vmatpush1.msra.mxu0 %v1237
    %1272 = vmatprep.subr.mxu0 0.0
    %1273 = vmatpush1.msra.mxu0 %v1236
    %1274 = vmatprep.subr.mxu0 0.0
    %1275 = vmatpush1.msra.mxu0 %v1235
    %1276 = vmatprep.subr.mxu0 0.0
    %1277 = vmatpush1.msra.mxu0 %v1234
    %1278 = vmatprep.subr.mxu0 0.0
    %1279 = vmatpush1.msra.mxu0 %v1233
    %1280 = vmatprep.subr.mxu0 0.0
    %1281 = vmatpush1.msra.mxu0 %v1232
    %1282 = vmatprep.subr.mxu0 0.0
    %1283 = vmatpush1.msra.mxu0 %v1231
    %1284 = vmatprep.subr.mxu0 0.0
    %1285 = vmatpush1.msra.mxu0 %v1230
    %1286 = vmatprep.subr.mxu0 0.0
    %1287 = vmatpush1.msra.mxu0 %v1229
    %1288 = vmatprep.subr.mxu0 0.0
    %1289 = vmatpush1.msra.mxu0 %v1228
    %1290 = vmatprep.subr.mxu0 0.0
    %1291 = vmatpush1.msra.mxu0 %v1227
    %1292 = vmatprep.subr.mxu0 0.0
    %1293 = vmatpush1.msra.mxu0 %v1226
    %1294 = vmatprep.subr.mxu0 0.0
    %1295 = vmatpush1.msra.mxu0 %v1225
    %1296 = vmatprep.subr.mxu0 0.0
    %1297 = vmatpush1.msra.mxu0 %v1224
    %1298 = vmatprep.subr.mxu0 0.0
    %1299 = vmatpush2.msra.mxu0 0.0
    %1300 = vmatprep.subr.mxu0 0.0
    %1301 = vmatpush2.msra.mxu0 0.0
    %1302 = vmatprep.subr.mxu0 0.0
    %1303 = vmatpush2.msra.mxu0 0.0
    %1304 = vmatprep.subr.mxu0 0.0
    %1305 = vmatpush2.msra.mxu0 0.0
    %1306 = vmatprep.subr.mxu0 0.0
    %1307 = vmatpush2.msra.mxu0 0.0
    %1308 = vmatprep.subr.mxu0 0.0
    %1309 = vmatpush2.msra.mxu0 0.0
    %1310 = vmatprep.subr.mxu0 0.0
    %1311 = vmatpush2.msra.mxu0 0.0
    %1312 = vmatprep.subr.mxu0 0.0
    %1313 = vmatpush2.msra.mxu0 0.0
    %1314 = vmatprep.subr.mxu0 0.0
    %1315 = vmatpush2.msra.mxu0 0.0
    %1316 = vmatprep.subr.mxu0 0.0
    %1317 = vmatpush2.msra.mxu0 0.0
    %1318 = vmatprep.subr.mxu0 0.0
    %1319 = vmatpush2.msra.mxu0 0.0
    %1320 = vmatprep.subr.mxu0 0.0
    %1321 = vmatpush2.msra.mxu0 %v1244
    %1322 = vmatprep.subr.mxu0 0.0
    %1323 = vmatpush2.msra.mxu0 %v1243
    %1324 = vmatprep.subr.mxu0 0.0
    %1325 = vmatpush2.msra.mxu0 %v1242
    %1326 = vmatprep.subr.mxu0 0.0
    %1327 = vmatpush2.msra.mxu0 %v1241
    %1328 = vmatprep.subr.mxu0 0.0
    %1329 = vmatpush2.msra.mxu0 %v1240
    %1330 = vmatprep.mubr.f32.mxu0 %v1246
    %1331 = vmatmul.mubr.f32.gmra.mxu0 %v1210
    %v1332 = vpop.f32.mrf.mxu0
    %v1333 = vadd.f32 0.0, %v1332
    %v1334 = vpop.f32.mrf.mxu0
    %1335 = vmatprep.mubr.f32.mxu0 %v1249
    %1336 = vmatmul.mubr.f32.gmra.mxu0 %v1212
    %v1337 = vpop.f32.mrf.mxu0
    %v1338 = vadd.f32 0.0, %v1337
    %v1339 = vpop.f32.mrf.mxu0
    %1340 = vmatprep.mubr.f32.mxu0 %v1252
    %1341 = vmatmul.mubr.f32.gmra.mxu0 %v1214
    %v1342 = vpop.f32.mrf.mxu0
    %v1343 = vadd.f32 0.0, %v1342
    %v1344 = vpop.f32.mrf.mxu0
    %1345 = vmatprep.mubr.f32.mxu0 %v1255
    %1346 = vmatmul.mubr.f32.gmra.mxu0 %v1216
    %v1347 = vpop.f32.mrf.mxu0
    %v1348 = vadd.f32 0.0, %v1347
    %v1349 = vpop.f32.mrf.mxu0
    %1350 = vmatprep.mubr.f32.mxu0 %v1258
    %1351 = vmatmul.mubr.f32.gmra.mxu0 %v1218
    %v1352 = vpop.f32.mrf.mxu0
    %v1353 = vadd.f32 0.0, %v1352
    %v1354 = vpop.f32.mrf.mxu0
    %1355 = vmatprep.mubr.f32.mxu0 %v1261
    %1356 = vmatmul.mubr.f32.gmra.mxu0 %v1220
    %v1357 = vpop.f32.mrf.mxu0
    %v1358 = vadd.f32 0.0, %v1357
    %v1359 = vpop.f32.mrf.mxu0
    %1360 = vmatprep.mubr.f32.mxu0 %v1264
    %1361 = vmatmul.mubr.f32.gmra.mxu0 %v1222
    %v1362 = vpop.f32.mrf.mxu0
    %v1363 = vadd.f32 0.0, %v1362
    %v1364 = vpop.f32.mrf.mxu0
    %1365 = vdwg.mxu0
    %v1366 = vld [vmem:[#allocation4] sm:$0xff]
    %v1367 = vld [vmem:[#allocation4 + $0x8] sm:$0xff]
    %v1368 = vld [vmem:[#allocation4 + $0x10] sm:$0xff]
    %v1369 = vld [vmem:[#allocation4 + $0x18] sm:$0xff]
    %v1370 = vld [vmem:[#allocation4 + $0x20] sm:$0xff]
    %v1371 = vld [vmem:[#allocation4 + $0x28] sm:$0xff]
    %v1372 = vld [vmem:[#allocation4 + $0x30] sm:$0xff]
    %v1373 = vld [vmem:[#allocation4 + $0x38] sm:$0xff]
    %v1374 = vld [vmem:[#allocation4 + $0x40] sm:$0xff]
    %v1375 = vld [vmem:[#allocation4 + $0x48] sm:$0xff]
    %v1376 = vld [vmem:[#allocation4 + $0x50] sm:$0xff]
    %v1377 = vld [vmem:[#allocation4 + $0x58] sm:$0xff]
    %v1378 = vld [vmem:[#allocation4 + $0x60] sm:$0xff]
    %v1379 = vld [vmem:[#allocation4 + $0x68] sm:$0xff]
    %v1380 = vld [vmem:[#allocation4 + $0x70] sm:$0xff]
    %v1381 = vld [vmem:[#allocation4 + $0x78] sm:$0xff]
    %v1382 = vld [vmem:[#allocation4 + $0x80] sm:$0xff]
    %v1383 = vld [vmem:[#allocation4 + $0x88] sm:$0xff]
    %v1384 = vld [vmem:[#allocation4 + $0x90] sm:$0xff]
    %v1385 = vld [vmem:[#allocation4 + $0x98] sm:$0xff]
    %v1386 = vld [vmem:[#allocation4 + $0xa0] sm:$0xff]
    %1387 = vmatprep.subr.mxu0 0.0
    %1388 = vmatpush1.msra.mxu0 %v1381
    %1389 = vmatprep.subr.mxu0 0.0
    %1390 = vmatpush1.msra.mxu0 %v1380
    %1391 = vmatprep.subr.mxu0 0.0
    %1392 = vmatpush1.msra.mxu0 %v1379
    %1393 = vmatprep.subr.mxu0 0.0
    %1394 = vmatpush1.msra.mxu0 %v1378
    %1395 = vmatprep.subr.mxu0 0.0
    %1396 = vmatpush1.msra.mxu0 %v1377
    %1397 = vmatprep.subr.mxu0 0.0
    %1398 = vmatpush1.msra.mxu0 %v1376
    %1399 = vmatprep.subr.mxu0 0.0
    %1400 = vmatpush1.msra.mxu0 %v1375
    %1401 = vmatprep.subr.mxu0 0.0
    %1402 = vmatpush1.msra.mxu0 %v1374
    %1403 = vmatprep.subr.mxu0 0.0
    %1404 = vmatpush1.msra.mxu0 %v1373
    %1405 = vmatprep.subr.mxu0 0.0
    %1406 = vmatpush1.msra.mxu0 %v1372
    %1407 = vmatprep.subr.mxu0 0.0
    %1408 = vmatpush1.msra.mxu0 %v1371
    %1409 = vmatprep.subr.mxu0 0.0
    %1410 = vmatpush1.msra.mxu0 %v1370
    %1411 = vmatprep.subr.mxu0 0.0
    %1412 = vmatpush1.msra.mxu0 %v1369
    %1413 = vmatprep.subr.mxu0 0.0
    %1414 = vmatpush1.msra.mxu0 %v1368
    %1415 = vmatprep.subr.mxu0 0.0
    %1416 = vmatpush1.msra.mxu0 %v1367
    %1417 = vmatprep.subr.mxu0 0.0
    %1418 = vmatpush1.msra.mxu0 %v1366
    %1419 = vmatprep.subr.mxu0 0.0
    %1420 = vmatpush2.msra.mxu0 0.0
    %1421 = vmatprep.subr.mxu0 0.0
    %1422 = vmatpush2.msra.mxu0 0.0
    %1423 = vmatprep.subr.mxu0 0.0
    %1424 = vmatpush2.msra.mxu0 0.0
    %1425 = vmatprep.subr.mxu0 0.0
    %1426 = vmatpush2.msra.mxu0 0.0
    %1427 = vmatprep.subr.mxu0 0.0
    %1428 = vmatpush2.msra.mxu0 0.0
    %1429 = vmatprep.subr.mxu0 0.0
    %1430 = vmatpush2.msra.mxu0 0.0
    %1431 = vmatprep.subr.mxu0 0.0
    %1432 = vmatpush2.msra.mxu0 0.0
    %1433 = vmatprep.subr.mxu0 0.0
    %1434 = vmatpush2.msra.mxu0 0.0
    %1435 = vmatprep.subr.mxu0 0.0
    %1436 = vmatpush2.msra.mxu0 0.0
    %1437 = vmatprep.subr.mxu0 0.0
    %1438 = vmatpush2.msra.mxu0 0.0
    %1439 = vmatprep.subr.mxu0 0.0
    %1440 = vmatpush2.msra.mxu0 0.0
    %1441 = vmatprep.subr.mxu0 0.0
    %1442 = vmatpush2.msra.mxu0 %v1386
    %1443 = vmatprep.subr.mxu0 0.0
    %1444 = vmatpush2.msra.mxu0 %v1385
    %1445 = vmatprep.subr.mxu0 0.0
    %1446 = vmatpush2.msra.mxu0 %v1384
    %1447 = vmatprep.subr.mxu0 0.0
    %1448 = vmatpush2.msra.mxu0 %v1383
    %1449 = vmatprep.subr.mxu0 0.0
    %1450 = vmatpush2.msra.mxu0 %v1382
    %1451 = vmatprep.mubr.f32.mxu0 %v1246
    %1452 = vmatmul.mubr.f32.gmra.mxu0 %v1210
    %v1453 = vpop.f32.mrf.mxu0
    %v1454 = vadd.f32 0.0, %v1453
    %v1455 = vpop.f32.mrf.mxu0
    %1456 = vmatprep.mubr.f32.mxu0 %v1249
    %1457 = vmatmul.mubr.f32.gmra.mxu0 %v1212
    %v1458 = vpop.f32.mrf.mxu0
    %v1459 = vadd.f32 0.0, %v1458
    %v1460 = vpop.f32.mrf.mxu0
    %1461 = vmatprep.mubr.f32.mxu0 %v1252
    %1462 = vmatmul.mubr.f32.gmra.mxu0 %v1214
    %v1463 = vpop.f32.mrf.mxu0
    %v1464 = vadd.f32 0.0, %v1463
    %v1465 = vpop.f32.mrf.mxu0
    %1466 = vmatprep.mubr.f32.mxu0 %v1255
    %1467 = vmatmul.mubr.f32.gmra.mxu0 %v1216
    %v1468 = vpop.f32.mrf.mxu0
    %v1469 = vadd.f32 0.0, %v1468
    %v1470 = vpop.f32.mrf.mxu0
    %1471 = vmatprep.mubr.f32.mxu0 %v1258
    %1472 = vmatmul.mubr.f32.gmra.mxu0 %v1218
    %v1473 = vpop.f32.mrf.mxu0
    %v1474 = vadd.f32 0.0, %v1473
    %v1475 = vpop.f32.mrf.mxu0
    %1476 = vmatprep.mubr.f32.mxu0 %v1261
    %1477 = vmatmul.mubr.f32.gmra.mxu0 %v1220
    %v1478 = vpop.f32.mrf.mxu0
    %v1479 = vadd.f32 0.0, %v1478
    %v1480 = vpop.f32.mrf.mxu0
    %1481 = vmatprep.mubr.f32.mxu0 %v1264
    %1482 = vmatmul.mubr.f32.gmra.mxu0 %v1222
    %v1483 = vpop.f32.mrf.mxu0
    %v1484 = vadd.f32 0.0, %v1483
    %v1485 = vpop.f32.mrf.mxu0
    %1486 = vdwg.mxu0
    %v1487 = vmax.f32 %v1333, %v1454
    %v1488 = vmax.f32 %v1338, %v1459
    %v1489 = vmax.f32 %v1343, %v1464
    %v1490 = vmax.f32 %v1348, %v1469
    %v1491 = vmax.f32 %v1353, %v1474
    %v1492 = vmax.f32 %v1358, %v1479
    %v1493 = vmax.f32 %v1363, %v1484
    %v1494 = vld [vmem:[%s8] sm:$0xff]
    %v1495 = vld [vmem:[%s8 + $0x8] sm:$0xff]
    %v1496 = vld [vmem:[%s8 + $0x10] sm:$0xff]
    %v1497 = vld [vmem:[%s8 + $0x18] sm:$0xf]
    %vm1498 = vcmask 457728
    %v1500 = vsel %vm1498, %v1494, 0
    %v1503 = vsel %vm1498, %v1495, 0
    %v1506 = vsel %vm1498, %v1496, 0
    %v1509 = vsel %vm1498, %v1497, 0
    %1511 = vmatprep.subr.mxu0 0.0
    %1512 = vmatpush1.msra.mxu0 0.0
    %1513 = vmatprep.subr.mxu0 0.0
    %1514 = vmatpush1.msra.mxu0 0.0
    %1515 = vmatprep.subr.mxu0 0.0
    %1516 = vmatpush1.msra.mxu0 0.0
    %1517 = vmatprep.subr.mxu0 0.0
    %1518 = vmatpush1.msra.mxu0 0.0
    %1519 = vmatprep.subr.mxu0 0.0
    %1520 = vmatpush1.msra.mxu0 0.0
    %1521 = vmatprep.subr.mxu0 0.0
    %1522 = vmatpush1.msra.mxu0 0.0
    %1523 = vmatprep.subr.mxu0 0.0
    %1524 = vmatpush1.msra.mxu0 0.0
    %1525 = vmatprep.subr.mxu0 0.0
    %1526 = vmatpush1.msra.mxu0 0.0
    %1527 = vmatprep.subr.mxu0 0.0
    %1528 = vmatpush1.msra.mxu0 0.0
    %1529 = vmatprep.subr.mxu0 0.0
    %1530 = vmatpush1.msra.mxu0 %v1493
    %1531 = vmatprep.subr.mxu0 0.0
    %1532 = vmatpush1.msra.mxu0 %v1492
    %1533 = vmatprep.subr.mxu0 0.0
    %1534 = vmatpush1.msra.mxu0 %v1491
    %1535 = vmatprep.subr.mxu0 0.0
    %1536 = vmatpush1.msra.mxu0 %v1490
    %1537 = vmatprep.subr.mxu0 0.0
    %1538 = vmatpush1.msra.mxu0 %v1489
    %1539 = vmatprep.subr.mxu0 0.0
    %1540 = vmatpush1.msra.mxu0 %v1488
    %1541 = vmatprep.subr.mxu0 0.0
    %1542 = vmatpush1.msra.mxu0 %v1487
    %1543 = vmatprep.subr.mxu0 0.0
    %1544 = vmatpush2.msra.mxu0 0.0
    %1545 = vmatprep.subr.mxu0 0.0
    %1546 = vmatpush2.msra.mxu0 0.0
    %1547 = vmatprep.subr.mxu0 0.0
    %1548 = vmatpush2.msra.mxu0 0.0
    %1549 = vmatprep.subr.mxu0 0.0
    %1550 = vmatpush2.msra.mxu0 0.0
    %1551 = vmatprep.subr.mxu0 0.0
    %1552 = vmatpush2.msra.mxu0 0.0
    %1553 = vmatprep.subr.mxu0 0.0
    %1554 = vmatpush2.msra.mxu0 0.0
    %1555 = vmatprep.subr.mxu0 0.0
    %1556 = vmatpush2.msra.mxu0 0.0
    %1557 = vmatprep.subr.mxu0 0.0
    %1558 = vmatpush2.msra.mxu0 0.0
    %1559 = vmatprep.subr.mxu0 0.0
    %1560 = vmatpush2.msra.mxu0 0.0
    %1561 = vmatprep.subr.mxu0 0.0
    %1562 = vmatpush2.msra.mxu0 0.0
    %1563 = vmatprep.subr.mxu0 0.0
    %1564 = vmatpush2.msra.mxu0 0.0
    %1565 = vmatprep.subr.mxu0 0.0
    %1566 = vmatpush2.msra.mxu0 0.0
    %1567 = vmatprep.subr.mxu0 0.0
    %1568 = vmatpush2.msra.mxu0 0.0
    %1569 = vmatprep.subr.mxu0 0.0
    %1570 = vmatpush2.msra.mxu0 0.0
    %1571 = vmatprep.subr.mxu0 0.0
    %1572 = vmatpush2.msra.mxu0 0.0
    %1573 = vmatprep.subr.mxu0 0.0
    %1574 = vmatpush2.msra.mxu0 0.0
    %1575 = vmatprep.mubr.f32.mxu0 0.0
    %1576 = vmatmul.mubr.f32.gmra.mxu0 %v1500
    %v1577 = vpop.f32.mrf.mxu0
    %v1578 = vadd.f32 0.0, %v1577
    %v1579 = vpop.f32.mrf.mxu0
    %1580 = vmatprep.mubr.f32.mxu0 0.0
    %1581 = vmatmul.mubr.f32.gmra.mxu0 %v1503
    %v1582 = vpop.f32.mrf.mxu0
    %v1583 = vadd.f32 0.0, %v1582
    %v1584 = vpop.f32.mrf.mxu0
    %1585 = vmatprep.mubr.f32.mxu0 0.0
    %1586 = vmatmul.mubr.f32.gmra.mxu0 %v1506
    %v1587 = vpop.f32.mrf.mxu0
    %v1588 = vadd.f32 0.0, %v1587
    %v1589 = vpop.f32.mrf.mxu0
    %1590 = vmatprep.mubr.f32.mxu0 0.0
    %1591 = vmatmul.mubr.f32.gmra.mxu0 %v1509
    %v1592 = vpop.f32.mrf.mxu0
    %v1593 = vadd.f32 0.0, %v1592
    %v1594 = vpop.f32.mrf.mxu0
    %1595 = vdwg.mxu0
    %v1596 = vld [vmem:[%s9] sm:$0xff]
    %v1597 = vld [vmem:[%s9 + $0x8] sm:$0xff]
    %v1598 = vld [vmem:[%s9 + $0x10] sm:$0xff]
    %v1599 = vld [vmem:[%s9 + $0x18] sm:$0xf]
    %v1601 = vsel %vm1498, %v1596, 0
    %v1604 = vsel %vm1498, %v1597, 0
    %v1607 = vsel %vm1498, %v1598, 0
    %v1610 = vsel %vm1498, %v1599, 0
    %1612 = vmatprep.subr.mxu0 0.0
    %1613 = vmatpush1.msra.mxu0 0.0
    %1614 = vmatprep.subr.mxu0 0.0
    %1615 = vmatpush1.msra.mxu0 0.0
    %1616 = vmatprep.subr.mxu0 0.0
    %1617 = vmatpush1.msra.mxu0 0.0
    %1618 = vmatprep.subr.mxu0 0.0
    %1619 = vmatpush1.msra.mxu0 0.0
    %1620 = vmatprep.subr.mxu0 0.0
    %1621 = vmatpush1.msra.mxu0 0.0
    %1622 = vmatprep.subr.mxu0 0.0
    %1623 = vmatpush1.msra.mxu0 0.0
    %1624 = vmatprep.subr.mxu0 0.0
    %1625 = vmatpush1.msra.mxu0 0.0
    %1626 = vmatprep.subr.mxu0 0.0
    %1627 = vmatpush1.msra.mxu0 0.0
    %1628 = vmatprep.subr.mxu0 0.0
    %1629 = vmatpush1.msra.mxu0 0.0
    %1630 = vmatprep.subr.mxu0 0.0
    %1631 = vmatpush1.msra.mxu0 %v1493
    %1632 = vmatprep.subr.mxu0 0.0
    %1633 = vmatpush1.msra.mxu0 %v1492
    %1634 = vmatprep.subr.mxu0 0.0
    %1635 = vmatpush1.msra.mxu0 %v1491
    %1636 = vmatprep.subr.mxu0 0.0
    %1637 = vmatpush1.msra.mxu0 %v1490
    %1638 = vmatprep.subr.mxu0 0.0
    %1639 = vmatpush1.msra.mxu0 %v1489
    %1640 = vmatprep.subr.mxu0 0.0
    %1641 = vmatpush1.msra.mxu0 %v1488
    %1642 = vmatprep.subr.mxu0 0.0
    %1643 = vmatpush1.msra.mxu0 %v1487
    %1644 = vmatprep.subr.mxu0 0.0
    %1645 = vmatpush2.msra.mxu0 0.0
    %1646 = vmatprep.subr.mxu0 0.0
    %1647 = vmatpush2.msra.mxu0 0.0
    %1648 = vmatprep.subr.mxu0 0.0
    %1649 = vmatpush2.msra.mxu0 0.0
    %1650 = vmatprep.subr.mxu0 0.0
    %1651 = vmatpush2.msra.mxu0 0.0
    %1652 = vmatprep.subr.mxu0 0.0
    %1653 = vmatpush2.msra.mxu0 0.0
    %1654 = vmatprep.subr.mxu0 0.0
    %1655 = vmatpush2.msra.mxu0 0.0
    %1656 = vmatprep.subr.mxu0 0.0
    %1657 = vmatpush2.msra.mxu0 0.0
    %1658 = vmatprep.subr.mxu0 0.0
    %1659 = vmatpush2.msra.mxu0 0.0
    %1660 = vmatprep.subr.mxu0 0.0
    %1661 = vmatpush2.msra.mxu0 0.0
    %1662 = vmatprep.subr.mxu0 0.0
    %1663 = vmatpush2.msra.mxu0 0.0
    %1664 = vmatprep.subr.mxu0 0.0
    %1665 = vmatpush2.msra.mxu0 0.0
    %1666 = vmatprep.subr.mxu0 0.0
    %1667 = vmatpush2.msra.mxu0 0.0
    %1668 = vmatprep.subr.mxu0 0.0
    %1669 = vmatpush2.msra.mxu0 0.0
    %1670 = vmatprep.subr.mxu0 0.0
    %1671 = vmatpush2.msra.mxu0 0.0
    %1672 = vmatprep.subr.mxu0 0.0
    %1673 = vmatpush2.msra.mxu0 0.0
    %1674 = vmatprep.subr.mxu0 0.0
    %1675 = vmatpush2.msra.mxu0 0.0
    %1676 = vmatprep.mubr.f32.mxu0 0.0
    %1677 = vmatmul.mubr.f32.gmra.mxu0 %v1601
    %v1678 = vpop.f32.mrf.mxu0
    %v1679 = vadd.f32 0.0, %v1678
    %v1680 = vpop.f32.mrf.mxu0
    %1681 = vmatprep.mubr.f32.mxu0 0.0
    %1682 = vmatmul.mubr.f32.gmra.mxu0 %v1604
    %v1683 = vpop.f32.mrf.mxu0
    %v1684 = vadd.f32 0.0, %v1683
    %v1685 = vpop.f32.mrf.mxu0
    %1686 = vmatprep.mubr.f32.mxu0 0.0
    %1687 = vmatmul.mubr.f32.gmra.mxu0 %v1607
    %v1688 = vpop.f32.mrf.mxu0
    %v1689 = vadd.f32 0.0, %v1688
    %v1690 = vpop.f32.mrf.mxu0
    %1691 = vmatprep.mubr.f32.mxu0 0.0
    %1692 = vmatmul.mubr.f32.gmra.mxu0 %v1610
    %v1693 = vpop.f32.mrf.mxu0
    %v1694 = vadd.f32 0.0, %v1693
    %v1695 = vpop.f32.mrf.mxu0
    %1696 = vdwg.mxu0
    %v1697 = vmax.f32 %v1578, %v1679
    %v1698 = vmax.f32 %v1583, %v1684
    %v1699 = vmax.f32 %v1588, %v1689
    %v1700 = vmax.f32 %v1593, %v1694
    %v1703 = vrot.slane %v1697, 1
    %v1704 = vrot.slane %v1698, 1
    %v1705 = vsel %vm109, %v1703, %v1704
    %1706 = vrot.lane.b32.xlu0 %v1705, 84
    %v1707 = vpop.permute.xlu0 %1706
    %1708 = vrot.lane.b32.xlu0 %v1704, 84
    %v1709 = vpop.permute.xlu0 %1708
    %v1712 = vrot.slane %v1697, 2
    %v1713 = vrot.slane %v1698, 2
    %v1714 = vsel %vm129, %v1712, %v1713
    %1715 = vrot.lane.b32.xlu0 %v1714, 40
    %v1716 = vpop.permute.xlu0 %1715
    %1717 = vrot.lane.b32.xlu0 %v1713, 40
    %v1718 = vpop.permute.xlu0 %1717
    %v1721 = vrot.slane %v1697, 3
    %v1722 = vrot.slane %v1698, 3
    %v1723 = vsel %vm149, %v1721, %v1722
    %1724 = vrot.lane.b32.xlu0 %v1723, 124
    %v1725 = vpop.permute.xlu0 %1724
    %1726 = vrot.lane.b32.xlu0 %v1722, 124
    %v1727 = vpop.permute.xlu0 %1726
    %v1730 = vrot.slane %v1697, 4
    %v1731 = vrot.slane %v1698, 4
    %v1732 = vsel %vm169, %v1730, %v1731
    %1733 = vrot.lane.b32.xlu0 %v1732, 80
    %v1734 = vpop.permute.xlu0 %1733
    %1735 = vrot.lane.b32.xlu0 %v1731, 80
    %v1736 = vpop.permute.xlu0 %1735
    %vm1739 = vcmask 687104
    %v1740 = vsel %vm1739, %v1697, %v1707
    %v1741 = vsel %vm1739, %v1698, %v1709
    %v1742 = vsel %vm883, %v1707, %v1716
    %v1743 = vsel %vm883, %v1709, %v1718
    %vm1744 = vcmask 1014784
    %v1745 = vsel %vm1744, %v1742, %v1725
    %v1746 = vsel %vm1744, %v1743, %v1727
    %vm1747 = vcmask 654336
    %v1748 = vsel %vm1747, %v1725, %v1734
    %v1749 = vsel %vm1747, %v1727, %v1736
    %v1752 = vrot.slane %v1699, 1
    %v1753 = vsel %vm109, %v1704, %v1752
    %v1754 = vrot.slane %v1700, 1
    %v1755 = vsel %vm109, %v1752, %v1754
    %1756 = vrot.lane.b32.xlu0 %v1753, 84
    %v1757 = vpop.permute.xlu0 %1756
    %1758 = vrot.lane.b32.xlu0 %v1755, 84
    %v1759 = vpop.permute.xlu0 %1758
    %v1762 = vrot.slane %v1699, 2
    %v1763 = vrot.slane %v1700, 2
    %v1764 = vsel %vm129, %v1762, %v1763
    %1765 = vrot.lane.b32.xlu0 %v1762, 40
    %v1766 = vpop.permute.xlu0 %1765
    %1767 = vrot.lane.b32.xlu0 %v1764, 40
    %v1768 = vpop.permute.xlu0 %1767
    %v1771 = vrot.slane %v1699, 3
    %v1772 = vrot.slane %v1700, 3
    %v1773 = vsel %vm149, %v1771, %v1772
    %1774 = vrot.lane.b32.xlu0 %v1771, 124
    %v1775 = vpop.permute.xlu0 %1774
    %1776 = vrot.lane.b32.xlu0 %v1773, 124
    %v1777 = vpop.permute.xlu0 %1776
    %v1780 = vrot.slane %v1699, 4
    %v1781 = vrot.slane %v1700, 4
    %v1782 = vsel %vm169, %v1780, %v1781
    %1783 = vrot.lane.b32.xlu0 %v1780, 80
    %v1784 = vpop.permute.xlu0 %1783
    %1785 = vrot.lane.b32.xlu0 %v1782, 80
    %v1786 = vpop.permute.xlu0 %1785
    %v1789 = vsel %vm1739, %v1698, %v1757
    %v1790 = vsel %vm1739, %v1699, %v1759
    %v1791 = vsel %vm883, %v1757, %v1766
    %v1792 = vsel %vm883, %v1759, %v1768
    %v1793 = vsel %vm1744, %v1791, %v1775
    %v1794 = vsel %vm1744, %v1792, %v1777
    %v1795 = vsel %vm1747, %v1775, %v1784
    %v1796 = vsel %vm1747, %v1777, %v1786
    %v1803 = vrot.slane %v1789, 4
    %v1804 = vrot.slane %v1790, 4
    %v1805 = vsel %vm169, %v1803, %v1804
    %v1806 = vrot.slane %v1793, 4
    %v1807 = vrot.slane %v1794, 4
    %v1808 = vsel %vm169, %v1806, %v1807
    %v1809 = vrot.slane %v1795, 4
    %v1810 = vrot.slane %v1796, 4
    %v1811 = vsel %vm169, %v1809, %v1810
    %v1812 = vrot.slane %v1784, 4
    %v1813 = vrot.slane %v1786, 4
    %v1814 = vsel %vm169, %v1812, %v1813
    %vm1823 = vcmask 1041408
    %v1824 = vsel %vm1823, %v1741, %v1805
    %v1825 = vsel %vm1823, %v1746, %v1808
    %v1826 = vsel %vm1823, %v1749, %v1811
    %v1827 = vsel %vm1823, %v1736, %v1814
    %v1828 = vpack.c.bf16 %v1824, %v1740
    %v1829 = vpack.c.bf16 %v1825, %v1745
    %v1830 = vpack.c.bf16 %v1826, %v1748
    %v1831 = vpack.c.bf16 %v1827, %v1734
    %v1832 = vpack.c.bf16 %v1804, %v1804
    %v1833 = vpack.c.bf16 %v1807, %v1807
    %v1834 = vpack.c.bf16 %v1810, %v1810
    %v1835 = vpack.c.bf16 %v1813, %v1813
    %v1836 = vld [vmem:[%s10] sm:$0xff]
    %v1837 = vld [vmem:[%s10 + $0x8] sm:$0xff]
    %v1838 = vld [vmem:[%s10 + $0x10] sm:$0xff]
    %v1839 = vld [vmem:[%s10 + $0x18] sm:$0xff]
    %v1840 = vld [vmem:[%s10 + $0x20] sm:$0xff]
    %v1841 = vld [vmem:[%s10 + $0x28] sm:$0xff]
    %v1842 = vld [vmem:[%s10 + $0x30] sm:$0xff]
    %v1843 = vld [vmem:[%s10 + $0x38] sm:$0xff]
    %v1844 = vld [vmem:[%s10 + $0x40] sm:$0xff]
    %v1845 = vld [vmem:[%s10 + $0x48] sm:$0xff]
    %v1846 = vld [vmem:[%s10 + $0x50] sm:$0xff]
    %v1847 = vld [vmem:[%s10 + $0x58] sm:$0xff]
    %v1848 = vld [vmem:[%s10 + $0x60] sm:$0xff]
    %v1849 = vld [vmem:[%s10 + $0x68] sm:$0xff]
    %v1850 = vld [vmem:[%s10 + $0x70] sm:$0xff]
    %v1851 = vld [vmem:[%s10 + $0x78] sm:$0xff]
    %v1852 = vld [vmem:[%s10 + $0x80] sm:$0xff]
    %v1853 = vld [vmem:[%s10 + $0x88] sm:$0xff]
    %v1854 = vld [vmem:[%s10 + $0x90] sm:$0xff]
    %v1855 = vld [vmem:[%s10 + $0x98] sm:$0xff]
    %v1856 = vld [vmem:[%s10 + $0xa0] sm:$0xff]
    %v1857 = vld [vmem:[%s10 + $0xa8] sm:$0xff]
    %v1858 = vld [vmem:[%s10 + $0xb0] sm:$0xff]
    %v1859 = vld [vmem:[%s10 + $0xb8] sm:$0xff]
    %v1860 = vld [vmem:[%s10 + $0xc0] sm:$0xff]
    %v1861 = vld [vmem:[%s10 + $0xc8] sm:$0xff]
    %v1862 = vld [vmem:[%s10 + $0xd0] sm:$0xff]
    %v1863 = vld [vmem:[%s10 + $0xd8] sm:$0xff]
    %v1864 = vld [vmem:[%s10 + $0xe0] sm:$0xff]
    %v1865 = vld [vmem:[%s10 + $0xe8] sm:$0xff]
    %v1866 = vld [vmem:[%s10 + $0xf0] sm:$0xff]
    %v1867 = vld [vmem:[%s10 + $0xf8] sm:$0xff]
    %v1868 = vld [vmem:[%s10 + $0x100] sm:$0xff]
    %v1869 = vld [vmem:[%s10 + $0x108] sm:$0xff]
    %v1870 = vld [vmem:[%s10 + $0x110] sm:$0xff]
    %v1871 = vld [vmem:[%s10 + $0x118] sm:$0xff]
    %v1872 = vld [vmem:[%s10 + $0x120] sm:$0xff]
    %v1873 = vld [vmem:[%s10 + $0x128] sm:$0xff]
    %v1874 = vld [vmem:[%s10 + $0x130] sm:$0xff]
    %v1875 = vld [vmem:[%s10 + $0x138] sm:$0xff]
    %v1876 = vld [vmem:[%s10 + $0x140] sm:$0xff]
    %v1877 = vld [vmem:[%s10 + $0x148] sm:$0xff]
    %v1878 = vld [vmem:[%s10 + $0x150] sm:$0xff]
    %v1879 = vld [vmem:[%s10 + $0x158] sm:$0xff]
    %v1880 = vld [vmem:[%s10 + $0x160] sm:$0xff]
    %v1881 = vld [vmem:[%s10 + $0x168] sm:$0xff]
    %v1882 = vld [vmem:[%s10 + $0x170] sm:$0xff]
    %v1883 = vld [vmem:[%s10 + $0x178] sm:$0xff]
    %v1884 = vld [vmem:[%s10 + $0x180] sm:$0xff]
    %v1885 = vld [vmem:[%s10 + $0x188] sm:$0xff]
    %v1886 = vld [vmem:[%s10 + $0x190] sm:$0xff]
    %v1887 = vld [vmem:[%s10 + $0x198] sm:$0xff]
    %v1888 = vld [vmem:[%s10 + $0x1a0] sm:$0x33]
    %v1942 = vunpack.c.l.b16 %v1836
    %v1943 = vunpack.c.h.b16 %v1836
    %v1944 = vunpack.c.l.b16 %v1837
    %v1945 = vunpack.c.h.b16 %v1837
    %v1946 = vunpack.c.l.b16 %v1838
    %v1947 = vunpack.c.h.b16 %v1838
    %v1948 = vunpack.c.l.b16 %v1839
    %v1949 = vunpack.c.h.b16 %v1839
    %v1950 = vunpack.c.l.b16 %v1840
    %v1951 = vunpack.c.h.b16 %v1840
    %v1952 = vunpack.c.l.b16 %v1841
    %v1953 = vunpack.c.h.b16 %v1841
    %v1954 = vunpack.c.l.b16 %v1842
    %v1955 = vunpack.c.h.b16 %v1842
    %v1956 = vunpack.c.l.b16 %v1843
    %v1957 = vunpack.c.h.b16 %v1843
    %v1958 = vunpack.c.l.b16 %v1844
    %v1959 = vunpack.c.h.b16 %v1844
    %v1960 = vunpack.c.l.b16 %v1845
    %v1961 = vunpack.c.h.b16 %v1845
    %v1962 = vunpack.c.l.b16 %v1846
    %v1963 = vunpack.c.h.b16 %v1846
    %v1964 = vunpack.c.l.b16 %v1847
    %v1965 = vunpack.c.h.b16 %v1847
    %v1966 = vunpack.c.l.b16 %v1848
    %v1967 = vunpack.c.h.b16 %v1848
    %v1968 = vunpack.c.l.b16 %v1849
    %v1969 = vunpack.c.h.b16 %v1849
    %v1970 = vunpack.c.l.b16 %v1850
    %v1971 = vunpack.c.h.b16 %v1850
    %v1972 = vunpack.c.l.b16 %v1851
    %v1973 = vunpack.c.h.b16 %v1851
    %v1974 = vunpack.c.l.b16 %v1852
    %v1975 = vunpack.c.h.b16 %v1852
    %v1976 = vunpack.c.l.b16 %v1853
    %v1977 = vunpack.c.h.b16 %v1853
    %v1978 = vunpack.c.l.b16 %v1854
    %v1979 = vunpack.c.h.b16 %v1854
    %v1980 = vunpack.c.l.b16 %v1855
    %v1981 = vunpack.c.h.b16 %v1855
    %v1982 = vunpack.c.l.b16 %v1856
    %v1983 = vunpack.c.h.b16 %v1856
    %v1984 = vunpack.c.l.b16 %v1857
    %v1985 = vunpack.c.h.b16 %v1857
    %v1986 = vunpack.c.l.b16 %v1858
    %v1987 = vunpack.c.h.b16 %v1858
    %v1988 = vunpack.c.l.b16 %v1859
    %v1989 = vunpack.c.h.b16 %v1859
    %v1990 = vunpack.c.l.b16 %v1860
    %v1991 = vunpack.c.h.b16 %v1860
    %v1992 = vunpack.c.l.b16 %v1861
    %v1993 = vunpack.c.h.b16 %v1861
    %v1994 = vunpack.c.l.b16 %v1862
    %v1995 = vunpack.c.h.b16 %v1862
    %v1996 = vunpack.c.l.b16 %v1863
    %v1997 = vunpack.c.h.b16 %v1863
    %v1998 = vunpack.c.l.b16 %v1864
    %v1999 = vunpack.c.h.b16 %v1864
    %v2000 = vunpack.c.l.b16 %v1865
    %v2001 = vunpack.c.h.b16 %v1865
    %v2002 = vunpack.c.l.b16 %v1866
    %v2003 = vunpack.c.h.b16 %v1866
    %v2004 = vunpack.c.l.b16 %v1867
    %v2005 = vunpack.c.h.b16 %v1867
    %v2006 = vunpack.c.l.b16 %v1868
    %v2007 = vunpack.c.h.b16 %v1868
    %v2008 = vunpack.c.l.b16 %v1869
    %v2009 = vunpack.c.h.b16 %v1869
    %v2010 = vunpack.c.l.b16 %v1870
    %v2011 = vunpack.c.h.b16 %v1870
    %v2012 = vunpack.c.l.b16 %v1871
    %v2013 = vunpack.c.h.b16 %v1871
    %v2014 = vunpack.c.l.b16 %v1872
    %v2015 = vunpack.c.h.b16 %v1872
    %v2016 = vunpack.c.l.b16 %v1873
    %v2017 = vunpack.c.h.b16 %v1873
    %v2018 = vunpack.c.l.b16 %v1874
    %v2019 = vunpack.c.h.b16 %v1874
    %v2020 = vunpack.c.l.b16 %v1875
    %v2021 = vunpack.c.h.b16 %v1875
    %v2022 = vunpack.c.l.b16 %v1876
    %v2023 = vunpack.c.h.b16 %v1876
    %v2024 = vunpack.c.l.b16 %v1877
    %v2025 = vunpack.c.h.b16 %v1877
    %v2026 = vunpack.c.l.b16 %v1878
    %v2027 = vunpack.c.h.b16 %v1878
    %v2028 = vunpack.c.l.b16 %v1879
    %v2029 = vunpack.c.h.b16 %v1879
    %v2030 = vunpack.c.l.b16 %v1880
    %v2031 = vunpack.c.h.b16 %v1880
    %v2032 = vunpack.c.l.b16 %v1881
    %v2033 = vunpack.c.h.b16 %v1881
    %v2034 = vunpack.c.l.b16 %v1882
    %v2035 = vunpack.c.h.b16 %v1882
    %v2036 = vunpack.c.l.b16 %v1883
    %v2037 = vunpack.c.h.b16 %v1883
    %v2038 = vunpack.c.l.b16 %v1884
    %v2039 = vunpack.c.h.b16 %v1884
    %v2040 = vunpack.c.l.b16 %v1885
    %v2041 = vunpack.c.h.b16 %v1885
    %v2042 = vunpack.c.l.b16 %v1886
    %v2043 = vunpack.c.h.b16 %v1886
    %v2044 = vunpack.c.l.b16 %v1887
    %v2045 = vunpack.c.h.b16 %v1887
    %v2046 = vunpack.c.l.b16 %v1888
    %v2047 = vunpack.c.h.b16 %v1888
    %v2048 = vpack.c.b16 %v1944, %v1942
    %v2049 = vpack.c.b16 %v1945, %v1943
    %v2050 = vpack.c.b16 %v1948, %v1946
    %v2051 = vpack.c.b16 %v1949, %v1947
    %v2052 = vpack.c.b16 %v1952, %v1950
    %v2053 = vpack.c.b16 %v1953, %v1951
    %v2054 = vpack.c.b16 %v1956, %v1954
    %v2055 = vpack.c.b16 %v1957, %v1955
    %v2056 = vpack.c.b16 %v1960, %v1958
    %v2057 = vpack.c.b16 %v1961, %v1959
    %v2058 = vpack.c.b16 %v1964, %v1962
    %v2059 = vpack.c.b16 %v1965, %v1963
    %v2060 = vpack.c.b16 %v1968, %v1966
    %v2061 = vpack.c.b16 %v1969, %v1967
    %v2062 = vpack.c.b16 %v1972, %v1970
    %v2063 = vpack.c.b16 %v1973, %v1971
    %v2064 = vpack.c.b16 %v1976, %v1974
    %v2065 = vpack.c.b16 %v1977, %v1975
    %v2066 = vpack.c.b16 %v1980, %v1978
    %v2067 = vpack.c.b16 %v1981, %v1979
    %v2068 = vpack.c.b16 %v1984, %v1982
    %v2069 = vpack.c.b16 %v1985, %v1983
    %v2070 = vpack.c.b16 %v1988, %v1986
    %v2071 = vpack.c.b16 %v1989, %v1987
    %v2072 = vpack.c.b16 %v1992, %v1990
    %v2073 = vpack.c.b16 %v1993, %v1991
    %v2074 = vpack.c.b16 %v1996, %v1994
    %v2075 = vpack.c.b16 %v1997, %v1995
    %v2076 = vpack.c.b16 %v2000, %v1998
    %v2077 = vpack.c.b16 %v2001, %v1999
    %v2078 = vpack.c.b16 %v2004, %v2002
    %v2079 = vpack.c.b16 %v2005, %v2003
    %v2080 = vpack.c.b16 %v2008, %v2006
    %v2081 = vpack.c.b16 %v2009, %v2007
    %v2082 = vpack.c.b16 %v2012, %v2010
    %v2083 = vpack.c.b16 %v2013, %v2011
    %v2084 = vpack.c.b16 %v2016, %v2014
    %v2085 = vpack.c.b16 %v2017, %v2015
    %v2086 = vpack.c.b16 %v2020, %v2018
    %v2087 = vpack.c.b16 %v2021, %v2019
    %v2088 = vpack.c.b16 %v2024, %v2022
    %v2089 = vpack.c.b16 %v2025, %v2023
    %v2090 = vpack.c.b16 %v2028, %v2026
    %v2091 = vpack.c.b16 %v2029, %v2027
    %v2092 = vpack.c.b16 %v2032, %v2030
    %v2093 = vpack.c.b16 %v2033, %v2031
    %v2094 = vpack.c.b16 %v2036, %v2034
    %v2095 = vpack.c.b16 %v2037, %v2035
    %v2096 = vpack.c.b16 %v2040, %v2038
    %v2097 = vpack.c.b16 %v2041, %v2039
    %v2098 = vpack.c.b16 %v2044, %v2042
    %v2099 = vpack.c.b16 %v2045, %v2043
    %v2100 = vpack.c.b16 %v2046, %v2046
    %v2101 = vpack.c.b16 %v2047, %v2047
    %vm2154 = vcmask 293888
    %v2156 = vsel %vm2154, %v1831, 0
    %v2159 = vsel %vm2154, %v1835, 0
    %v2162 = vsel %vm1823, %v2100, 0
    %v2165 = vsel %vm1823, %v2101, 0
    %2167 = vmatprep.subr.bf16.mxu0 %v2063
    %2168 = vmatpush1.bf16.msra.mxu0 %v2062
    %2169 = vmatprep.subr.bf16.mxu0 %v2061
    %2170 = vmatpush1.bf16.msra.mxu0 %v2060
    %2171 = vmatprep.subr.bf16.mxu0 %v2059
    %2172 = vmatpush1.bf16.msra.mxu0 %v2058
    %2173 = vmatprep.subr.bf16.mxu0 %v2057
    %2174 = vmatpush1.bf16.msra.mxu0 %v2056
    %2175 = vmatprep.subr.bf16.mxu0 %v2055
    %2176 = vmatpush1.bf16.msra.mxu0 %v2054
    %2177 = vmatprep.subr.bf16.mxu0 %v2053
    %2178 = vmatpush1.bf16.msra.mxu0 %v2052
    %2179 = vmatprep.subr.bf16.mxu0 %v2051
    %2180 = vmatpush1.bf16.msra.mxu0 %v2050
    %2181 = vmatprep.subr.bf16.mxu0 %v2049
    %2182 = vmatpush1.bf16.msra.mxu0 %v2048
    %2183 = vmatprep.subr.bf16.mxu0 %v2079
    %2184 = vmatpush2.bf16.msra.mxu0 %v2078
    %2185 = vmatprep.subr.bf16.mxu0 %v2077
    %2186 = vmatpush2.bf16.msra.mxu0 %v2076
    %2187 = vmatprep.subr.bf16.mxu0 %v2075
    %2188 = vmatpush2.bf16.msra.mxu0 %v2074
    %2189 = vmatprep.subr.bf16.mxu0 %v2073
    %2190 = vmatpush2.bf16.msra.mxu0 %v2072
    %2191 = vmatprep.subr.bf16.mxu0 %v2071
    %2192 = vmatpush2.bf16.msra.mxu0 %v2070
    %2193 = vmatprep.subr.bf16.mxu0 %v2069
    %2194 = vmatpush2.bf16.msra.mxu0 %v2068
    %2195 = vmatprep.subr.bf16.mxu0 %v2067
    %2196 = vmatpush2.bf16.msra.mxu0 %v2066
    %2197 = vmatprep.subr.bf16.mxu0 %v2065
    %2198 = vmatpush2.bf16.msra.mxu0 %v2064
    %2199 = vmatprep.mubr.bf16.mxu0 %v1829
    %2200 = vmatmul.mubr.bf16.gmra.mxu0 %v1828
    %v2201 = vpop.f32.mrf.mxu0
    %v2202 = vadd.f32 0.0, %v2201
    %v2203 = vpop.f32.mrf.mxu0
    %v2204 = vadd.f32 0.0, %v2203
    %v2205 = vpop.f32.mrf.mxu0
    %v2206 = vadd.f32 0.0, %v2205
    %v2207 = vpop.f32.mrf.mxu0
    %v2208 = vadd.f32 0.0, %v2207
    %2209 = vmatprep.mubr.bf16.mxu0 %v1833
    %2210 = vmatmul.mubr.bf16.gmra.mxu0 %v1832
    %v2211 = vpop.f32.mrf.mxu0
    %v2212 = vadd.f32 0.0, %v2211
    %v2213 = vpop.f32.mrf.mxu0
    %v2214 = vadd.f32 0.0, %v2213
    %v2215 = vpop.f32.mrf.mxu0
    %v2216 = vpop.f32.mrf.mxu0
    %2217 = vdwg.mxu0
    %2218 = vmatprep.subr.bf16.mxu0 %v2095
    %2219 = vmatpush1.bf16.msra.mxu0 %v2094
    %2220 = vmatprep.subr.bf16.mxu0 %v2093
    %2221 = vmatpush1.bf16.msra.mxu0 %v2092
    %2222 = vmatprep.subr.bf16.mxu0 %v2091
    %2223 = vmatpush1.bf16.msra.mxu0 %v2090
    %2224 = vmatprep.subr.bf16.mxu0 %v2089
    %2225 = vmatpush1.bf16.msra.mxu0 %v2088
    %2226 = vmatprep.subr.bf16.mxu0 %v2087
    %2227 = vmatpush1.bf16.msra.mxu0 %v2086
    %2228 = vmatprep.subr.bf16.mxu0 %v2085
    %2229 = vmatpush1.bf16.msra.mxu0 %v2084
    %2230 = vmatprep.subr.bf16.mxu0 %v2083
    %2231 = vmatpush1.bf16.msra.mxu0 %v2082
    %2232 = vmatprep.subr.bf16.mxu0 %v2081
    %2233 = vmatpush1.bf16.msra.mxu0 %v2080
    %2234 = vmatprep.subr.bf16.mxu0 0
    %2235 = vmatpush2.bf16.msra.mxu0 0
    %2236 = vmatprep.subr.bf16.mxu0 0
    %2237 = vmatpush2.bf16.msra.mxu0 0
    %2238 = vmatprep.subr.bf16.mxu0 0
    %2239 = vmatpush2.bf16.msra.mxu0 0
    %2240 = vmatprep.subr.bf16.mxu0 0
    %2241 = vmatpush2.bf16.msra.mxu0 0
    %2242 = vmatprep.subr.bf16.mxu0 0
    %2243 = vmatpush2.bf16.msra.mxu0 0
    %2244 = vmatprep.subr.bf16.mxu0 %v2165
    %2245 = vmatpush2.bf16.msra.mxu0 %v2162
    %2246 = vmatprep.subr.bf16.mxu0 %v2099
    %2247 = vmatpush2.bf16.msra.mxu0 %v2098
    %2248 = vmatprep.subr.bf16.mxu0 %v2097
    %2249 = vmatpush2.bf16.msra.mxu0 %v2096
    %2250 = vmatprep.mubr.bf16.mxu0 %v2156
    %2251 = vmatmul.mubr.bf16.gmra.mxu0 %v1830
    %v2252 = vpop.f32.mrf.mxu0
    %v2253 = vadd.f32 %v2202, %v2252
    %v2254 = vpop.f32.mrf.mxu0
    %v2255 = vadd.f32 %v2204, %v2254
    %v2256 = vpop.f32.mrf.mxu0
    %v2257 = vadd.f32 %v2206, %v2256
    %v2258 = vpop.f32.mrf.mxu0
    %v2259 = vadd.f32 %v2208, %v2258
    %2260 = vmatprep.mubr.bf16.mxu0 %v2159
    %2261 = vmatmul.mubr.bf16.gmra.mxu0 %v1834
    %v2262 = vpop.f32.mrf.mxu0
    %v2263 = vadd.f32 %v2212, %v2262
    %v2264 = vpop.f32.mrf.mxu0
    %v2265 = vadd.f32 %v2214, %v2264
    %v2266 = vpop.f32.mrf.mxu0
    %v2267 = vpop.f32.mrf.mxu0
    %2268 = vdwg.mxu0
    %v2269 = vadd.f32 %v2253, %v2257
    %v2270 = vsel %vm169, %v2263, 0.0
    %v2271 = vadd.f32 %v2269, %v2270
    %v2272 = vrot.slane %v2271, 4
    %v2273 = vadd.f32 %v2271, %v2272
    %v2274 = vrot.slane %v2273, 2
    %v2275 = vadd.f32 %v2273, %v2274
    %v2276 = vrot.slane %v2275, 1
    %v2277 = vadd.f32 %v2275, %v2276
    %v2278 = vsel %vm191, %v2255, 0.0
    %v2279 = vsel %vm191, %v2259, 0.0
    %v2280 = vadd.f32 %v2278, %v2279
    %vm2281 = vcmask 257024
    %v2282 = vsel %vm2281, %v2265, 0.0
    %v2283 = vadd.f32 %v2280, %v2282
    %v2284 = vrot.slane %v2283, 4
    %v2285 = vadd.f32 %v2283, %v2284
    %v2286 = vrot.slane %v2285, 2
    %v2287 = vadd.f32 %v2285, %v2286
    %v2288 = vrot.slane %v2287, 1
    %v2289 = vadd.f32 %v2287, %v2288
    %v2290 = vmul.f32 %v2253, %v2253
    %v2291 = vmul.f32 %v2255, %v2255
    %v2292 = vmul.f32 %v2257, %v2257
    %v2293 = vmul.f32 %v2259, %v2259
    %v2294 = vmul.f32 %v2263, %v2263
    %v2295 = vmul.f32 %v2265, %v2265
    %v2296 = vadd.f32 %v2290, %v2292
    %v2297 = vsel %vm169, %v2294, 0.0
    %v2298 = vadd.f32 %v2296, %v2297
    %v2299 = vrot.slane %v2298, 4
    %v2300 = vadd.f32 %v2298, %v2299
    %v2301 = vrot.slane %v2300, 2
    %v2302 = vadd.f32 %v2300, %v2301
    %v2303 = vrot.slane %v2302, 1
    %v2304 = vadd.f32 %v2302, %v2303
    %v2305 = vsel %vm191, %v2291, 0.0
    %v2306 = vsel %vm191, %v2293, 0.0
    %v2307 = vadd.f32 %v2305, %v2306
    %v2308 = vsel %vm2281, %v2295, 0.0
    %v2309 = vadd.f32 %v2307, %v2308
    %v2310 = vrot.slane %v2309, 4
    %v2311 = vadd.f32 %v2309, %v2310
    %v2312 = vrot.slane %v2311, 2
    %v2313 = vadd.f32 %v2311, %v2312
    %v2314 = vrot.slane %v2313, 1
    %v2315 = vadd.f32 %v2313, %v2314
    %v2316 = vsel %vm948, %v2277, %v2304
    %v2317 = vsel %vm948, %v2289, %v2315
    %v2318 = vld [vmem:[#allocation6] sm:$0xff]
    %v2319 = vld [vmem:[#allocation6 + $0x8] sm:$0xff]
    %v2320 = vld [vmem:[#allocation6 + $0x10] sm:$0xff]
    %v2321 = vld [vmem:[#allocation6 + $0x18] sm:$0xff]
    %v2322 = vld [vmem:[#allocation6 + $0x20] sm:$0xff]
    %v2323 = vld [vmem:[#allocation6 + $0x28] sm:$0xff]
    %v2324 = vld [vmem:[#allocation6 + $0x30] sm:$0xff]
    %v2325 = vld [vmem:[#allocation6 + $0x38] sm:$0xff]
    %v2326 = vld [vmem:[#allocation6 + $0x40] sm:$0xff]
    %v2327 = vld [vmem:[#allocation6 + $0x48] sm:$0xff]
    %v2328 = vld [vmem:[#allocation6 + $0x50] sm:$0xff]
    %v2329 = vld [vmem:[#allocation6 + $0x58] sm:$0xff]
    %v2330 = vld [vmem:[#allocation6 + $0x60] sm:$0xff]
    %v2331 = vld [vmem:[#allocation6 + $0x68] sm:$0xff]
    %v2332 = vld [vmem:[#allocation6 + $0x70] sm:$0xff]
    %v2333 = vld [vmem:[#allocation6 + $0x78] sm:$0xff]
    %v2334 = vld [vmem:[#allocation6 + $0x80] sm:$0xff]
    %v2335 = vld [vmem:[#allocation6 + $0x88] sm:$0xff]
    %v2336 = vld [vmem:[#allocation6 + $0x90] sm:$0xff]
    %v2337 = vld [vmem:[#allocation6 + $0x98] sm:$0xff]
    %v2339 = vsel %vm191, %v2317, 0
    %2341 = vmatprep.subr.mxu0 0.0
    %2342 = vmatpush1.msra.mxu0 %v2333
    %2343 = vmatprep.subr.mxu0 0.0
    %2344 = vmatpush1.msra.mxu0 %v2332
    %2345 = vmatprep.subr.mxu0 0.0
    %2346 = vmatpush1.msra.mxu0 %v2331
    %2347 = vmatprep.subr.mxu0 0.0
    %2348 = vmatpush1.msra.mxu0 %v2330
    %2349 = vmatprep.subr.mxu0 0.0
    %2350 = vmatpush1.msra.mxu0 %v2329
    %2351 = vmatprep.subr.mxu0 0.0
    %2352 = vmatpush1.msra.mxu0 %v2328
    %2353 = vmatprep.subr.mxu0 0.0
    %2354 = vmatpush1.msra.mxu0 %v2327
    %2355 = vmatprep.subr.mxu0 0.0
    %2356 = vmatpush1.msra.mxu0 %v2326
    %2357 = vmatprep.subr.mxu0 0.0
    %2358 = vmatpush1.msra.mxu0 %v2325
    %2359 = vmatprep.subr.mxu0 0.0
    %2360 = vmatpush1.msra.mxu0 %v2324
    %2361 = vmatprep.subr.mxu0 0.0
    %2362 = vmatpush1.msra.mxu0 %v2323
    %2363 = vmatprep.subr.mxu0 0.0
    %2364 = vmatpush1.msra.mxu0 %v2322
    %2365 = vmatprep.subr.mxu0 0.0
    %2366 = vmatpush1.msra.mxu0 %v2321
    %2367 = vmatprep.subr.mxu0 0.0
    %2368 = vmatpush1.msra.mxu0 %v2320
    %2369 = vmatprep.subr.mxu0 0.0
    %2370 = vmatpush1.msra.mxu0 %v2319
    %2371 = vmatprep.subr.mxu0 0.0
    %2372 = vmatpush1.msra.mxu0 %v2318
    %2373 = vmatprep.subr.mxu0 0.0
    %2374 = vmatpush2.msra.mxu0 0.0
    %2375 = vmatprep.subr.mxu0 0.0
    %2376 = vmatpush2.msra.mxu0 0.0
    %2377 = vmatprep.subr.mxu0 0.0
    %2378 = vmatpush2.msra.mxu0 0.0
    %2379 = vmatprep.subr.mxu0 0.0
    %2380 = vmatpush2.msra.mxu0 0.0
    %2381 = vmatprep.subr.mxu0 0.0
    %2382 = vmatpush2.msra.mxu0 0.0
    %2383 = vmatprep.subr.mxu0 0.0
    %2384 = vmatpush2.msra.mxu0 0.0
    %2385 = vmatprep.subr.mxu0 0.0
    %2386 = vmatpush2.msra.mxu0 0.0
    %2387 = vmatprep.subr.mxu0 0.0
    %2388 = vmatpush2.msra.mxu0 0.0
    %2389 = vmatprep.subr.mxu0 0.0
    %2390 = vmatpush2.msra.mxu0 0.0
    %2391 = vmatprep.subr.mxu0 0.0
    %2392 = vmatpush2.msra.mxu0 0.0
    %2393 = vmatprep.subr.mxu0 0.0
    %2394 = vmatpush2.msra.mxu0 0.0
    %2395 = vmatprep.subr.mxu0 0.0
    %2396 = vmatpush2.msra.mxu0 0.0
    %2397 = vmatprep.subr.mxu0 0.0
    %2398 = vmatpush2.msra.mxu0 %v2337
    %2399 = vmatprep.subr.mxu0 0.0
    %2400 = vmatpush2.msra.mxu0 %v2336
    %2401 = vmatprep.subr.mxu0 0.0
    %2402 = vmatpush2.msra.mxu0 %v2335
    %2403 = vmatprep.subr.mxu0 0.0
    %2404 = vmatpush2.msra.mxu0 %v2334
    %2405 = vmatprep.mubr.f32.mxu0 %v2339
    %2406 = vmatmul.mubr.f32.gmra.mxu0 %v2316
    %v2407 = vpop.f32.mrf.mxu0
    %v2408 = vadd.f32 0.0, %v2407
    %v2409 = vpop.f32.mrf.mxu0
    %2410 = vdwg.mxu0
    %v2411 = vmul.f32 %v2408, 0.005
    %v2412 = vmul.f32 %v2411, %v2411
    %v2414 = vrot.slane %v2412, 7
    %v2416 = vsub.f32 %v2411, %v2414
    %v2417 = vmax.f32 %v2416, 0.0
    %v2418 = vadd.f32 %v2417, 1e-05
    %v2419 = vrsqrt.pop %v2418
    %v2420 = vld [vmem:[%s13] sm:$0x1]
    %v2423 = vunpack.c.l.s4 1966171168
    %v2424 = vunpack.c.0.s8 %v2423
    %v2425 = vlaneseq
    %v2426 = vshrl.u32 %v2425, 7
    %v2427 = vsub.s32 %v2424, %v2426
    %v2428 = vrot.slane %v2419, %v2427
    %v2429 = vcombine.high %v2428, %v2428
    %v2431 = vunpack.c.l.s4 1966171168
    %v2432 = vunpack.c.0.s8 %v2431
    %v2433 = vlaneseq
    %v2434 = vshrl.u32 %v2433, 7
    %v2435 = vsub.s32 %v2432, %v2434
    %v2436 = vrot.slane %v2429, %v2435
    %v2438 = vmul.f32 %v2420, %v2436
    %v2439 = vld [vmem:[%s14] sm:$0x1]
    %v2440 = vmul.f32 %v2438, %v2411
    %v2441 = vsub.f32 %v2439, %v2440
    %v2443 = vlaneseq
    %v2444 = vshrl.u32 %v2443, 7
    %v2445 = vsub.s32 0, %v2444
    %v2446 = vrot.slane %v2441, %v2445
    %v2448 = vsel %vm948, %v2438, %v2446
    %v2449 = vld [vmem:[%s12] sm:$0xff]
    %v2450 = vld [vmem:[%s12 + $0x8] sm:$0xff]
    %v2451 = vld [vmem:[%s12 + $0x10] sm:$0xff]
    %v2452 = vld [vmem:[%s12 + $0x18] sm:$0xff]
    %vm2453 = vcmask 130048
    %v2455 = vsel %vm2453, %v2448, 0
    %2457 = vmatprep.subr.mxu0 0.0
    %2458 = vmatpush1.msra.mxu0 0.0
    %2459 = vmatprep.subr.mxu0 0.0
    %2460 = vmatpush1.msra.mxu0 0.0
    %2461 = vmatprep.subr.mxu0 0.0
    %2462 = vmatpush1.msra.mxu0 0.0
    %2463 = vmatprep.subr.mxu0 0.0
    %2464 = vmatpush1.msra.mxu0 0.0
    %2465 = vmatprep.subr.mxu0 0.0
    %2466 = vmatpush1.msra.mxu0 0.0
    %2467 = vmatprep.subr.mxu0 0.0
    %2468 = vmatpush1.msra.mxu0 0.0
    %2469 = vmatprep.subr.mxu0 0.0
    %2470 = vmatpush1.msra.mxu0 0.0
    %2471 = vmatprep.subr.mxu0 0.0
    %2472 = vmatpush1.msra.mxu0 0.0
    %2473 = vmatprep.subr.mxu0 0.0
    %2474 = vmatpush1.msra.mxu0 0.0
    %2475 = vmatprep.subr.mxu0 0.0
    %2476 = vmatpush1.msra.mxu0 0.0
    %2477 = vmatprep.subr.mxu0 0.0
    %2478 = vmatpush1.msra.mxu0 0.0
    %2479 = vmatprep.subr.mxu0 0.0
    %2480 = vmatpush1.msra.mxu0 0.0
    %2481 = vmatprep.subr.mxu0 0.0
    %2482 = vmatpush1.msra.mxu0 0.0
    %2483 = vmatprep.subr.mxu0 0.0
    %2484 = vmatpush1.msra.mxu0 0.0
    %2485 = vmatprep.subr.mxu0 %v2452
    %2486 = vmatpush1.msra.mxu0 %v2451
    %2487 = vmatprep.subr.mxu0 %v2450
    %2488 = vmatpush1.msra.mxu0 %v2449
    %2489 = vmatprep.subr.mxu0 0.0
    %2490 = vmatpush2.msra.mxu0 0.0
    %2491 = vmatprep.subr.mxu0 0.0
    %2492 = vmatpush2.msra.mxu0 0.0
    %2493 = vmatprep.subr.mxu0 0.0
    %2494 = vmatpush2.msra.mxu0 0.0
    %2495 = vmatprep.subr.mxu0 0.0
    %2496 = vmatpush2.msra.mxu0 0.0
    %2497 = vmatprep.subr.mxu0 0.0
    %2498 = vmatpush2.msra.mxu0 0.0
    %2499 = vmatprep.subr.mxu0 0.0
    %2500 = vmatpush2.msra.mxu0 0.0
    %2501 = vmatprep.subr.mxu0 0.0
    %2502 = vmatpush2.msra.mxu0 0.0
    %2503 = vmatprep.subr.mxu0 0.0
    %2504 = vmatpush2.msra.mxu0 0.0
    %2505 = vmatprep.subr.mxu0 0.0
    %2506 = vmatpush2.msra.mxu0 0.0
    %2507 = vmatprep.subr.mxu0 0.0
    %2508 = vmatpush2.msra.mxu0 0.0
    %2509 = vmatprep.subr.mxu0 0.0
    %2510 = vmatpush2.msra.mxu0 0.0
    %2511 = vmatprep.subr.mxu0 0.0
    %2512 = vmatpush2.msra.mxu0 0.0
    %2513 = vmatprep.subr.mxu0 0.0
    %2514 = vmatpush2.msra.mxu0 0.0
    %2515 = vmatprep.subr.mxu0 0.0
    %2516 = vmatpush2.msra.mxu0 0.0
    %2517 = vmatprep.subr.mxu0 0.0
    %2518 = vmatpush2.msra.mxu0 0.0
    %2519 = vmatprep.subr.mxu0 0.0
    %2520 = vmatpush2.msra.mxu0 0.0
    %2521 = vmatprep.mubr.f32.mxu0 0.0
    %2522 = vmatmul.mubr.f32.gmra.mxu0 %v2455
    %v2523 = vpop.f32.mrf.mxu0
    %v2524 = vadd.f32 0.0, %v2523
    %v2525 = vpop.f32.mrf.mxu0
    %v2526 = vadd.f32 0.0, %v2525
    %2527 = vdwg.mxu0
    %v2528 = vlaneseq
    %v2529 = vshrl.u32 %v2528, 7
    %v2530 = vsub.s32 0, %v2529
    %v2531 = vrot.slane %v2524, %v2530
    %v2532 = vlaneseq
    %v2533 = vshrl.u32 %v2532, 7
    %v2534 = vsub.s32 0, %v2533
    %v2535 = vrot.slane %v2526, %v2534
    %v2536 = vmul.f32 %v2253, %v2531
    %v2537 = vmul.f32 %v2255, %v2535
    %v2538 = vmul.f32 %v2257, %v2531
    %v2539 = vmul.f32 %v2259, %v2535
    %v2540 = vmul.f32 %v2263, %v2531
    %v2541 = vmul.f32 %v2265, %v2535
    %v2542 = vlaneseq
    %v2543 = vshrl.u32 %v2542, 7
    %v2544 = vsub.s32 1, %v2543
    %v2545 = vrot.slane %v2524, %v2544
    %v2546 = vlaneseq
    %v2547 = vshrl.u32 %v2546, 7
    %v2548 = vsub.s32 1, %v2547
    %v2549 = vrot.slane %v2526, %v2548
    %v2550 = vadd.f32 %v2536, %v2545
    %v2551 = vadd.f32 %v2537, %v2549
    %v2552 = vadd.f32 %v2538, %v2545
    %v2553 = vadd.f32 %v2539, %v2549
    %v2554 = vadd.f32 %v2540, %v2545
    %v2555 = vadd.f32 %v2541, %v2549
    %v2556 = vmax.f32 %v2550, 0.0
    %v2557 = vmax.f32 %v2551, 0.0
    %v2558 = vmax.f32 %v2552, 0.0
    %v2559 = vmax.f32 %v2553, 0.0
    %v2560 = vmax.f32 %v2554, 0.0
    %v2561 = vmax.f32 %v2555, 0.0
    %v2562 = vld [vmem:[%s15] sm:$0x3]
    %vm2563 = vcmask 162816
    %v2565 = vsel %vm2563, %v2562, 0
    %v2568 = vsel %vm169, %v2560, 0
    %v2571 = vsel %vm169, %v2561, 0
    %2573 = vmatprep.subr.mxu0 0.0
    %2574 = vmatpush1.msra.mxu0 0.0
    %2575 = vmatprep.subr.mxu0 0.0
    %2576 = vmatpush1.msra.mxu0 0.0
    %2577 = vmatprep.subr.mxu0 0.0
    %2578 = vmatpush1.msra.mxu0 0.0
    %2579 = vmatprep.subr.mxu0 0.0
    %2580 = vmatpush1.msra.mxu0 0.0
    %2581 = vmatprep.subr.mxu0 0.0
    %2582 = vmatpush1.msra.mxu0 0.0
    %2583 = vmatprep.subr.mxu0 0.0
    %2584 = vmatpush1.msra.mxu0 0.0
    %2585 = vmatprep.subr.mxu0 0.0
    %2586 = vmatpush1.msra.mxu0 0.0
    %2587 = vmatprep.subr.mxu0 0.0
    %2588 = vmatpush1.msra.mxu0 0.0
    %2589 = vmatprep.subr.mxu0 0.0
    %2590 = vmatpush1.msra.mxu0 0.0
    %2591 = vmatprep.subr.mxu0 0.0
    %2592 = vmatpush1.msra.mxu0 0.0
    %2593 = vmatprep.subr.mxu0 0.0
    %2594 = vmatpush1.msra.mxu0 0.0
    %2595 = vmatprep.subr.mxu0 0.0
    %2596 = vmatpush1.msra.mxu0 0.0
    %2597 = vmatprep.subr.mxu0 0.0
    %2598 = vmatpush1.msra.mxu0 0.0
    %2599 = vmatprep.subr.mxu0 %v2571
    %2600 = vmatpush1.msra.mxu0 %v2568
    %2601 = vmatprep.subr.mxu0 %v2559
    %2602 = vmatpush1.msra.mxu0 %v2558
    %2603 = vmatprep.subr.mxu0 %v2557
    %2604 = vmatpush1.msra.mxu0 %v2556
    %2605 = vmatprep.subr.mxu0 0.0
    %2606 = vmatpush2.msra.mxu0 0.0
    %2607 = vmatprep.subr.mxu0 0.0
    %2608 = vmatpush2.msra.mxu0 0.0
    %2609 = vmatprep.subr.mxu0 0.0
    %2610 = vmatpush2.msra.mxu0 0.0
    %2611 = vmatprep.subr.mxu0 0.0
    %2612 = vmatpush2.msra.mxu0 0.0
    %2613 = vmatprep.subr.mxu0 0.0
    %2614 = vmatpush2.msra.mxu0 0.0
    %2615 = vmatprep.subr.mxu0 0.0
    %2616 = vmatpush2.msra.mxu0 0.0
    %2617 = vmatprep.subr.mxu0 0.0
    %2618 = vmatpush2.msra.mxu0 0.0
    %2619 = vmatprep.subr.mxu0 0.0
    %2620 = vmatpush2.msra.mxu0 0.0
    %2621 = vmatprep.subr.mxu0 0.0
    %2622 = vmatpush2.msra.mxu0 0.0
    %2623 = vmatprep.subr.mxu0 0.0
    %2624 = vmatpush2.msra.mxu0 0.0
    %2625 = vmatprep.subr.mxu0 0.0
    %2626 = vmatpush2.msra.mxu0 0.0
    %2627 = vmatprep.subr.mxu0 0.0
    %2628 = vmatpush2.msra.mxu0 0.0
    %2629 = vmatprep.subr.mxu0 0.0
    %2630 = vmatpush2.msra.mxu0 0.0
    %2631 = vmatprep.subr.mxu0 0.0
    %2632 = vmatpush2.msra.mxu0 0.0
    %2633 = vmatprep.subr.mxu0 0.0
    %2634 = vmatpush2.msra.mxu0 0.0
    %2635 = vmatprep.subr.mxu0 0.0
    %2636 = vmatpush2.msra.mxu0 0.0
    %2637 = vmatprep.mubr.f32.mxu0 0.0
    %2638 = vmatmul.mubr.f32.gmra.mxu0 %v2565
    %v2639 = vpop.f32.mrf.mxu0
    %v2640 = vadd.f32 0.0, %v2639
    %v2641 = vpop.f32.mrf.mxu0
    %v2642 = vadd.f32 0.0, %v2641
    %2643 = vdwg.mxu0
    %v2645 = vsel %vm191, %v2642, 0
    %2647 = vmatprep.subr.mxu0 0.0
    %2648 = vmatpush1.msra.mxu0 %v2333
    %2649 = vmatprep.subr.mxu0 0.0
    %2650 = vmatpush1.msra.mxu0 %v2332
    %2651 = vmatprep.subr.mxu0 0.0
    %2652 = vmatpush1.msra.mxu0 %v2331
    %2653 = vmatprep.subr.mxu0 0.0
    %2654 = vmatpush1.msra.mxu0 %v2330
    %2655 = vmatprep.subr.mxu0 0.0
    %2656 = vmatpush1.msra.mxu0 %v2329
    %2657 = vmatprep.subr.mxu0 0.0
    %2658 = vmatpush1.msra.mxu0 %v2328
    %2659 = vmatprep.subr.mxu0 0.0
    %2660 = vmatpush1.msra.mxu0 %v2327
    %2661 = vmatprep.subr.mxu0 0.0
    %2662 = vmatpush1.msra.mxu0 %v2326
    %2663 = vmatprep.subr.mxu0 0.0
    %2664 = vmatpush1.msra.mxu0 %v2325
    %2665 = vmatprep.subr.mxu0 0.0
    %2666 = vmatpush1.msra.mxu0 %v2324
    %2667 = vmatprep.subr.mxu0 0.0
    %2668 = vmatpush1.msra.mxu0 %v2323
    %2669 = vmatprep.subr.mxu0 0.0
    %2670 = vmatpush1.msra.mxu0 %v2322
    %2671 = vmatprep.subr.mxu0 0.0
    %2672 = vmatpush1.msra.mxu0 %v2321
    %2673 = vmatprep.subr.mxu0 0.0
    %2674 = vmatpush1.msra.mxu0 %v2320
    %2675 = vmatprep.subr.mxu0 0.0
    %2676 = vmatpush1.msra.mxu0 %v2319
    %2677 = vmatprep.subr.mxu0 0.0
    %2678 = vmatpush1.msra.mxu0 %v2318
    %2679 = vmatprep.subr.mxu0 0.0
    %2680 = vmatpush2.msra.mxu0 0.0
    %2681 = vmatprep.subr.mxu0 0.0
    %2682 = vmatpush2.msra.mxu0 0.0
    %2683 = vmatprep.subr.mxu0 0.0
    %2684 = vmatpush2.msra.mxu0 0.0
    %2685 = vmatprep.subr.mxu0 0.0
    %2686 = vmatpush2.msra.mxu0 0.0
    %2687 = vmatprep.subr.mxu0 0.0
    %2688 = vmatpush2.msra.mxu0 0.0
    %2689 = vmatprep.subr.mxu0 0.0
    %2690 = vmatpush2.msra.mxu0 0.0
    %2691 = vmatprep.subr.mxu0 0.0
    %2692 = vmatpush2.msra.mxu0 0.0
    %2693 = vmatprep.subr.mxu0 0.0
    %2694 = vmatpush2.msra.mxu0 0.0
    %2695 = vmatprep.subr.mxu0 0.0
    %2696 = vmatpush2.msra.mxu0 0.0
    %2697 = vmatprep.subr.mxu0 0.0
    %2698 = vmatpush2.msra.mxu0 0.0
    %2699 = vmatprep.subr.mxu0 0.0
    %2700 = vmatpush2.msra.mxu0 0.0
    %2701 = vmatprep.subr.mxu0 0.0
    %2702 = vmatpush2.msra.mxu0 0.0
    %2703 = vmatprep.subr.mxu0 0.0
    %2704 = vmatpush2.msra.mxu0 %v2337
    %2705 = vmatprep.subr.mxu0 0.0
    %2706 = vmatpush2.msra.mxu0 %v2336
    %2707 = vmatprep.subr.mxu0 0.0
    %2708 = vmatpush2.msra.mxu0 %v2335
    %2709 = vmatprep.subr.mxu0 0.0
    %2710 = vmatpush2.msra.mxu0 %v2334
    %2711 = vmatprep.mubr.f32.mxu0 %v2645
    %2712 = vmatmul.mubr.f32.gmra.mxu0 %v2640
    %v2713 = vpop.f32.mrf.mxu0
    %v2714 = vadd.f32 0.0, %v2713
    %v2715 = vpop.f32.mrf.mxu0
    %2716 = vdwg.mxu0
    %v2717 = vmul.f32 %v2714, 0.01
    %v2718 = vld [vmem:[%s16] sm:$0xff]
    %v2719 = vld [vmem:[%s16 + $0x8] sm:$0xff]
    %v2720 = vld [vmem:[%s17] sm:$0x1]
    %v2722 = vlaneseq
    %v2723 = vshrl.u32 %v2722, 7
    %v2724 = vsub.s32 0, %v2723
    %v2725 = vrot.slane %v2720, %v2724
    %v2728 = vsel %vm2453, %v2717, 0
    %2730 = vmatprep.subr.mxu0 0.0
    %2731 = vmatpush1.msra.mxu0 0.0
    %2732 = vmatprep.subr.mxu0 0.0
    %2733 = vmatpush1.msra.mxu0 0.0
    %2734 = vmatprep.subr.mxu0 0.0
    %2735 = vmatpush1.msra.mxu0 0.0
    %2736 = vmatprep.subr.mxu0 0.0
    %2737 = vmatpush1.msra.mxu0 0.0
    %2738 = vmatprep.subr.mxu0 0.0
    %2739 = vmatpush1.msra.mxu0 0.0
    %2740 = vmatprep.subr.mxu0 0.0
    %2741 = vmatpush1.msra.mxu0 0.0
    %2742 = vmatprep.subr.mxu0 0.0
    %2743 = vmatpush1.msra.mxu0 0.0
    %2744 = vmatprep.subr.mxu0 0.0
    %2745 = vmatpush1.msra.mxu0 0.0
    %2746 = vmatprep.subr.mxu0 0.0
    %2747 = vmatpush1.msra.mxu0 0.0
    %2748 = vmatprep.subr.mxu0 0.0
    %2749 = vmatpush1.msra.mxu0 0.0
    %2750 = vmatprep.subr.mxu0 0.0
    %2751 = vmatpush1.msra.mxu0 0.0
    %2752 = vmatprep.subr.mxu0 0.0
    %2753 = vmatpush1.msra.mxu0 0.0
    %2754 = vmatprep.subr.mxu0 0.0
    %2755 = vmatpush1.msra.mxu0 0.0
    %2756 = vmatprep.subr.mxu0 0.0
    %2757 = vmatpush1.msra.mxu0 0.0
    %2758 = vmatprep.subr.mxu0 0.0
    %2759 = vmatpush1.msra.mxu0 %v2719
    %2760 = vmatprep.subr.mxu0 0.0
    %2761 = vmatpush1.msra.mxu0 %v2718
    %2762 = vmatprep.subr.mxu0 0.0
    %2763 = vmatpush2.msra.mxu0 0.0
    %2764 = vmatprep.subr.mxu0 0.0
    %2765 = vmatpush2.msra.mxu0 0.0
    %2766 = vmatprep.subr.mxu0 0.0
    %2767 = vmatpush2.msra.mxu0 0.0
    %2768 = vmatprep.subr.mxu0 0.0
    %2769 = vmatpush2.msra.mxu0 0.0
    %2770 = vmatprep.subr.mxu0 0.0
    %2771 = vmatpush2.msra.mxu0 0.0
    %2772 = vmatprep.subr.mxu0 0.0
    %2773 = vmatpush2.msra.mxu0 0.0
    %2774 = vmatprep.subr.mxu0 0.0
    %2775 = vmatpush2.msra.mxu0 0.0
    %2776 = vmatprep.subr.mxu0 0.0
    %2777 = vmatpush2.msra.mxu0 0.0
    %2778 = vmatprep.subr.mxu0 0.0
    %2779 = vmatpush2.msra.mxu0 0.0
    %2780 = vmatprep.subr.mxu0 0.0
    %2781 = vmatpush2.msra.mxu0 0.0
    %2782 = vmatprep.subr.mxu0 0.0
    %2783 = vmatpush2.msra.mxu0 0.0
    %2784 = vmatprep.subr.mxu0 0.0
    %2785 = vmatpush2.msra.mxu0 0.0
    %2786 = vmatprep.subr.mxu0 0.0
    %2787 = vmatpush2.msra.mxu0 0.0
    %2788 = vmatprep.subr.mxu0 0.0
    %2789 = vmatpush2.msra.mxu0 0.0
    %2790 = vmatprep.subr.mxu0 0.0
    %2791 = vmatpush2.msra.mxu0 0.0
    %2792 = vmatprep.subr.mxu0 0.0
    %2793 = vmatpush2.msra.mxu0 0.0
    %2794 = vmatprep.mubr.f32.mxu0 0.0
    %2795 = vmatmul.mubr.f32.gmra.mxu0 %v2728
    %v2796 = vpop.f32.mrf.mxu0
    %v2797 = vadd.f32 %v2725, %v2796
    %v2798 = vpop.f32.mrf.mxu0
    %2799 = vdwg.mxu0
    %vm2800 = vcmask 66560
    %2801 = vst.msk [vmem:[%s18] sm:$0x3] %vm2800, %v2797
    // Predicated region
    $region86: #{forward.1} parent=1 // pred_check
      _
    $region87: #{forward.1} parent=1 // pred_check_branch
      %2803 = sbr.rel (0) target = $region89
    $region88: #{forward.1} parent=1 // pred_region
      _
    $region89: #{forward.1} parent=1 // pred_fallthru
      _
    // Predicated region
    $region90: #{forward.1} parent=1 // pred_check
      _
    $region91: #{forward.1} parent=1 // pred_check_branch
      %2805 = sbr.rel (0) target = $region93
    $region92: #{forward.1} parent=1 // pred_region
      _
    $region93: #{forward.1} parent=1 // pred_fallthru
      _
    %2806 = vsyncpa [#allocation3], 1
    %2807 = vsyncpa [#allocation5], 1

</llo_original>
